<compile_context>
chip_gen: v5e
topology: v5e:2x2
jax: 0.10.0
libtpu: 0.0.40
codegen_flags: <defaults>
</compile_context>

<pallas_src>
import functools
import math

import jax
import jax.numpy as jnp
from jax.experimental import pallas as pl
from jax.experimental.pallas import tpu as pltpu


# ---------------------------------------------------------------------------
# Pallas kernel: one full ALBERT layer; grid = (batch, ffn_intermediate_chunk)
# ---------------------------------------------------------------------------
def _layer_norm(x, g, b, eps):
    mu = jnp.mean(x, axis=-1, keepdims=True)
    xc = x - mu
    var = jnp.mean(xc * xc, axis=-1, keepdims=True)
    return xc * jax.lax.rsqrt(var + eps) * g + b


def albert_layer_kernel(
    x_ref, mask_ref,
    wq_ref, bq_ref, wk_ref, bk_ref, wv_ref, bv_ref,
    wd_ref, bd_ref, g1_ref, b1_ref,
    wf_ref, bf_ref, wo_ref, bo_ref, g2_ref, b2_ref,
    o_ref,
    qh_sc, kh_sc, vh_sc, attn_bf_sc, attn_f32_sc, acc_sc,
    *, num_heads, head_dim, eps,
):
    c = pl.program_id(1)
    nc = pl.num_programs(1)

    # ------------------ attention + first LayerNorm (once per batch elem) ----
    @pl.when(c == 0)
    def _attention():
        x = x_ref[0].astype(jnp.float32)            # (S, H) residual path, f32
        xb = x.astype(jnp.bfloat16)                 # bf16 operand for the MXU

        # Q/K/V projections: full-width (S,H)@(H,H) MXU matmuls, f32 accumulate.
        # 1/sqrt(head_dim) is pre-folded into wq/bq at the wrapper.
        q = jnp.dot(xb, wq_ref[...], preferred_element_type=jnp.float32) + bq_ref[...]
        k = jnp.dot(xb, wk_ref[...], preferred_element_type=jnp.float32) + bk_ref[...]
        v = jnp.dot(xb, wv_ref[...], preferred_element_type=jnp.float32) + bv_ref[...]

        # Stage per-head views (nh, S, hd) in VMEM via cheap static lane-slice
        # stores, so all heads' attention runs as heads-batched dot_generals
        # (replaces the old per-head unrolled score/softmax/PV loop).
        # NOTE: for real ALBERT dims, extracting 128-lane head *pairs* (2 x
        # head_dim=64) would keep these slices lane-dense.
        for h in range(num_heads):
            sl = slice(h * head_dim, (h + 1) * head_dim)
            qh_sc[h] = q[:, sl].astype(jnp.bfloat16)
            kh_sc[h] = k[:, sl].astype(jnp.bfloat16)
            vh_sc[h] = v[:, sl].astype(jnp.bfloat16)

        qh = qh_sc[...]                             # (nh, S, hd) bf16
        kh = kh_sc[...]
        vh = vh_sc[...]

        # Heads-batched QK^T, masked softmax, PV — one pass over all heads.
        scores = jnp.einsum("hqd,hkd->hqk", qh, kh,
                            preferred_element_type=jnp.float32)     # (nh,S,S)
        scores = scores + mask_ref[...].astype(jnp.float32)          # (1,1,S) bcast once
        scores = scores - jnp.max(scores, axis=-1, keepdims=True)
        e = jnp.exp(scores)
        denom = jnp.sum(e, axis=-1, keepdims=True)
        probs = e * pl.reciprocal(denom, approx=True)                # EUP reciprocal
        ctx = jnp.einsum("hqk,hkd->hqd", probs.astype(jnp.bfloat16), vh,
                         preferred_element_type=jnp.float32)         # (nh,S,hd)

        # Re-pack heads into an (S, H) bf16 slab so the dense projection is ONE
        # full-width matmul (== einsum 'bfnd,ndh->bfh' of the reference).
        for h in range(num_heads):
            sl = slice(h * head_dim, (h + 1) * head_dim)
            attn_bf_sc[:, sl] = ctx[h].astype(jnp.bfloat16)

        proj = jnp.dot(attn_bf_sc[...], wd_ref[...],
                       preferred_element_type=jnp.float32) + bd_ref[...]

        attn = _layer_norm(x + proj, g1_ref[...], b1_ref[...], eps)
        attn_f32_sc[...] = attn                         # f32: final residual only
        attn_bf_sc[...] = attn.astype(jnp.bfloat16)     # bf16 FFN LHS, cast once
        acc_sc[...] = jnp.zeros_like(acc_sc)

    # ------------------ FFN, (optionally) chunked over the intermediate dim --
    attn_b = attn_bf_sc[...]                            # (S, H) bf16 cached at c==0
    h1 = jnp.dot(attn_b, wf_ref[...],
                 preferred_element_type=jnp.float32) + bf_ref[...]   # (S, CI)
    # gelu_new (tanh approximation) -- ALBERT default hidden_act, f32.
    cg = math.sqrt(2.0 / math.pi)
    h1 = 0.5 * h1 * (1.0 + jnp.tanh(cg * (h1 + 0.044715 * h1 * h1 * h1)))
    acc_sc[...] += jnp.dot(h1.astype(jnp.bfloat16), wo_ref[...],
                           preferred_element_type=jnp.float32)

    # ------------------ finalize: second LayerNorm + write-out ---------------
    @pl.when(c == nc - 1)
    def _finalize():
        out = _layer_norm(acc_sc[...] + bo_ref[...] + attn_f32_sc[...],
                          g2_ref[...], b2_ref[...], eps)
        o_ref[0] = out.astype(o_ref.dtype)


# ---------------------------------------------------------------------------
# Wrappers
# ---------------------------------------------------------------------------
def albert_layer_pallas(x, mask, p, *, num_heads, eps=1e-12, ffn_chunk=None,
                        vmem_limit_bytes=48 * 1024 * 1024):
    B, S, H = x.shape
    I = p["wf"].shape[1]
    head_dim = H // num_heads

    # FFN intermediate chunking.  Default (None): whole intermediate resident
    # (NC=1) — the right call for ALBERT-base/large (bf16 wf+wo ~9 MiB), it
    # drops the per-chunk accumulator RMW / grid-step overhead.  For very large
    # I (xxlarge) pass an explicit divisor; non-divisors are rejected instead
    # of silently making the full weight resident (VMEM footgun on v7x).
    if ffn_chunk is None or ffn_chunk >= I:
        CI = I
    else:
        if I % ffn_chunk != 0:
            raise ValueError(f"ffn_chunk={ffn_chunk} must divide intermediate size {I}")
        CI = ffn_chunk
    NC = I // CI

    # Fold the attention score scaling into the query projection (weights AND
    # bias) — removes num_heads * S^2 VPU multiplies from the kernel.
    inv_sqrt_d = 1.0 / math.sqrt(head_dim)
    wq = (p["wq"].astype(jnp.float32) * inv_sqrt_d).astype(p["wq"].dtype)
    bq = (p["bq"].astype(jnp.float32) * inv_sqrt_d).astype(p["bq"].dtype)

    mask3 = mask.reshape(B, 1, S)

    def const_spec(a):
        nd = a.ndim
        return pl.BlockSpec(a.shape, lambda b, c, _nd=nd: (0,) * _nd)

    in_specs = [
        pl.BlockSpec((1, S, H), lambda b, c: (b, 0, 0)),     # x
        pl.BlockSpec((1, 1, S), lambda b, c: (b, 0, 0)),     # additive mask
        const_spec(wq), const_spec(bq),
        const_spec(p["wk"]), const_spec(p["bk"]),
        const_spec(p["wv"]), const_spec(p["bv"]),
        const_spec(p["wd"]), const_spec(p["bd"]),
        const_spec(p["g1"]), const_spec(p["b1"]),
        pl.BlockSpec((H, CI), lambda b, c: (0, c)),          # wf chunk (streamed)
        pl.BlockSpec((1, CI), lambda b, c: (0, c)),          # bf chunk
        pl.BlockSpec((CI, H), lambda b, c: (c, 0)),          # wo chunk (streamed)
        const_spec(p["bo"]), const_spec(p["g2"]), const_spec(p["b2"]),
    ]

    kernel = functools.partial(
        albert_layer_kernel, num_heads=num_heads, head_dim=head_dim, eps=eps
    )

    return pl.pallas_call(
        kernel,
        out_shape=jax.ShapeDtypeStruct((B, S, H), x.dtype),
        grid_spec=pltpu.PrefetchScalarGridSpec(
            num_scalar_prefetch=0,
            grid=(B, NC),
            in_specs=in_specs,
            out_specs=pl.BlockSpec((1, S, H), lambda b, c: (b, 0, 0)),
            scratch_shapes=[
                pltpu.VMEM((num_heads, S, head_dim), jnp.bfloat16),  # q heads
                pltpu.VMEM((num_heads, S, head_dim), jnp.bfloat16),  # k heads
                pltpu.VMEM((num_heads, S, head_dim), jnp.bfloat16),  # v heads
                pltpu.VMEM((S, H), jnp.bfloat16),   # ctx slab -> bf16 attn out (FFN LHS)
                pltpu.VMEM((S, H), jnp.float32),    # f32 attention output (residual)
                pltpu.VMEM((S, H), jnp.float32),    # FFN output accumulator
            ],
        ),
        compiler_params=pltpu.CompilerParams(
            # TODO(synk): for B==1 serving on v7x, add a q-tile "parallel" axis so
            # both TensorCores are used.
            dimension_semantics=("parallel", "arbitrary"),
            vmem_limit_bytes=vmem_limit_bytes,
        ),
    )(x, mask3,
      wq, bq, p["wk"], p["bk"], p["wv"], p["bv"],
      p["wd"], p["bd"], p["g1"], p["b1"],
      p["wf"], p["bf"], p["wo"], p["bo"], p["g2"], p["b2"])


def albert_layer_group_pallas(x, mask, layer_params, *, num_heads):
    # AlbertLayerGroup.forward: sequentially apply inner_group_num AlbertLayers.
    # TODO(synk): fuse layers into one pallas_call / prefetch next layer's weights.
    for p in layer_params:
        x = albert_layer_pallas(x, mask, p, num_heads=num_heads)
    return x


# ---------------------------------------------------------------------------
# Deterministic parameter init (shapes from AlbertLayer.__init__)
# ---------------------------------------------------------------------------
def init_layer_params(key, H, I):
    ks = jax.random.split(key, 12)
    n = lambda k, shape: (0.02 * jax.random.normal(k, shape, jnp.float32))
    return dict(
        wq=n(ks[0], (H, H)), bq=n(ks[1], (1, H)),
        wk=n(ks[2], (H, H)), bk=n(ks[3], (1, H)),
        wv=n(ks[4], (H, H)), bv=n(ks[5], (1, H)),
        wd=n(ks[6], (H, H)), bd=n(ks[7], (1, H)),
        g1=jnp.ones((1, H), jnp.float32), b1=jnp.zeros((1, H), jnp.float32),
        wf=n(ks[8], (H, I)), bf=n(ks[9], (1, I)),
        wo=n(ks[10], (I, H)), bo=n(ks[11], (1, H)),
        g2=jnp.ones((1, H), jnp.float32), b2=jnp.zeros((1, H), jnp.float32),
    )


def cast_matmul_weights_to_bf16(p):
    # Weight matrices live in bf16 (half the HBM traffic / VMEM footprint);
    # biases and LayerNorm params stay f32.
    out = dict(p)
    for k in ("wq", "wk", "wv", "wd", "wf", "wo"):
        out[k] = p[k].astype(jnp.bfloat16)
    return out


# ---------------------------------------------------------------------------
# Pure-JAX reference (mirrors the PyTorch forward, eval mode, f32 math; the
# bf16 weights are promoted to f32 so weight quantization is shared).
# ---------------------------------------------------------------------------
def _ln_ref(x, g, b, eps=1e-12):
    mu = jnp.mean(x, axis=-1, keepdims=True)
    var = jnp.mean((x - mu) ** 2, axis=-1, keepdims=True)
    return (x - mu) * jax.lax.rsqrt(var + eps) * g + b


def albert_layer_ref(x, mask, p, num_heads, eps=1e-12):
    B, S, H = x.shape
    dh = H // num_heads
    f32 = lambda a: a.astype(jnp.float32)
    q = (x @ f32(p["wq"]) + p["bq"]).reshape(B, S, num_heads, dh).transpose(0, 2, 1, 3)
    k = (x @ f32(p["wk"]) + p["bk"]).reshape(B, S, num_heads, dh).transpose(0, 2, 1, 3)
    v = (x @ f32(p["wv"]) + p["bv"]).reshape(B, S, num_heads, dh).transpose(0, 2, 1, 3)
    scores = jnp.einsum("bhqd,bhkd->bhqk", q, k) / math.sqrt(dh)
    scores = scores + mask[:, None, None, :]
    probs = jax.nn.softmax(scores, axis=-1)
    ctx = jnp.einsum("bhqk,bhkd->bhqd", probs, v).transpose(0, 2, 1, 3).reshape(B, S, H)
    proj = ctx @ f32(p["wd"]) + p["bd"]
    attn_out = _ln_ref(x + proj, p["g1"], p["b1"], eps)
    h1 = attn_out @ f32(p["wf"]) + p["bf"]
    c = math.sqrt(2.0 / math.pi)
    h1 = 0.5 * h1 * (1.0 + jnp.tanh(c * (h1 + 0.044715 * h1 ** 3)))
    h2 = h1 @ f32(p["wo"]) + p["bo"]
    return _ln_ref(h2 + attn_out, p["g2"], p["b2"], eps)


def albert_layer_group_ref(x, mask, layer_params, num_heads):
    for p in layer_params:
        x = albert_layer_ref(x, mask, p, num_heads)
    return x


# ---------------------------------------------------------------------------
if __name__ == "__main__":
    B, S, H, NUM_HEADS, INTERMEDIATE, INNER_GROUP_NUM = 2, 8, 32, 4, 64, 2

    key = jax.random.PRNGKey(0)
    kx, *klayers = jax.random.split(key, 1 + INNER_GROUP_NUM)
    x = jax.random.normal(kx, (B, S, H), jnp.float32)

    # BERT-style additive attention mask: last 2 tokens of batch 1 are padding.
    valid = jnp.ones((B, S), jnp.float32).at[1, -2:].set(0.0)
    attn_mask = (1.0 - valid) * -10000.0

    layer_params = [cast_matmul_weights_to_bf16(init_layer_params(k, H, INTERMEDIATE))
                    for k in klayers]

    out = albert_layer_group_pallas(x, attn_mask, layer_params, num_heads=NUM_HEADS)
    out = jax.block_until_ready(out)

    ref = albert_layer_group_ref(x, attn_mask, layer_params, NUM_HEADS)
    assert out.shape == (B, S, H)
    # bf16 matmul operands + approx reciprocal vs f32 reference -> relaxed tol.
    assert jnp.allclose(out, ref, atol=2e-2, rtol=2e-2), "mismatch vs pure-JAX reference"

    print("KERNEL_OK")
</pallas_src>

<mosaic_0001>
module attributes {stable_mosaic.version = 11 : i64} {
  func.func @albert_layer_kernel(%arg0: i32, %arg1: i32, %arg2: memref<1x8x32xf32, #tpu.memory_space<vmem>>, %arg3: memref<1x1x8xf32, #tpu.memory_space<vmem>>, %arg4: memref<32x32xbf16, #tpu.memory_space<vmem>>, %arg5: memref<1x32xf32, #tpu.memory_space<vmem>>, %arg6: memref<32x32xbf16, #tpu.memory_space<vmem>>, %arg7: memref<1x32xf32, #tpu.memory_space<vmem>>, %arg8: memref<32x32xbf16, #tpu.memory_space<vmem>>, %arg9: memref<1x32xf32, #tpu.memory_space<vmem>>, %arg10: memref<32x32xbf16, #tpu.memory_space<vmem>>, %arg11: memref<1x32xf32, #tpu.memory_space<vmem>>, %arg12: memref<1x32xf32, #tpu.memory_space<vmem>>, %arg13: memref<1x32xf32, #tpu.memory_space<vmem>>, %arg14: memref<32x64xbf16, #tpu.memory_space<vmem>>, %arg15: memref<1x64xf32, #tpu.memory_space<vmem>>, %arg16: memref<64x32xbf16, #tpu.memory_space<vmem>>, %arg17: memref<1x32xf32, #tpu.memory_space<vmem>>, %arg18: memref<1x32xf32, #tpu.memory_space<vmem>>, %arg19: memref<1x32xf32, #tpu.memory_space<vmem>>, %arg20: memref<1x8x32xf32, #tpu.memory_space<vmem>>, %arg21: memref<4x8x8xbf16, #tpu.memory_space<vmem>>, %arg22: memref<4x8x8xbf16, #tpu.memory_space<vmem>>, %arg23: memref<4x8x8xbf16, #tpu.memory_space<vmem>>, %arg24: memref<8x32xbf16, #tpu.memory_space<vmem>>, %arg25: memref<8x32xf32, #tpu.memory_space<vmem>>, %arg26: memref<8x32xf32, #tpu.memory_space<vmem>>) attributes {dimension_semantics = [#tpu.dimension_semantics<parallel>, #tpu.dimension_semantics<arbitrary>], iteration_bounds = array<i64: 2, 1>, scalar_prefetch = 0 : i64, scratch_operands = 6 : i64, tpu.core_type = #tpu.core_type<tc>, window_params = [{transform_indices = @transform_0, window_bounds = array<i64: 1, 8, 32>}, {transform_indices = @transform_1, window_bounds = array<i64: 1, 1, 8>}, {pipeline_mode = #tpu.pipeline_mode<synchronous>, transform_indices = @transform_2, window_bounds = array<i64: 32, 32>}, {pipeline_mode = #tpu.pipeline_mode<synchronous>, transform_indices = @transform_3, window_bounds = array<i64: 1, 32>}, {pipeline_mode = #tpu.pipeline_mode<synchronous>, transform_indices = @transform_4, window_bounds = array<i64: 32, 32>}, {pipeline_mode = #tpu.pipeline_mode<synchronous>, transform_indices = @transform_5, window_bounds = array<i64: 1, 32>}, {pipeline_mode = #tpu.pipeline_mode<synchronous>, transform_indices = @transform_6, window_bounds = array<i64: 32, 32>}, {pipeline_mode = #tpu.pipeline_mode<synchronous>, transform_indices = @transform_7, window_bounds = array<i64: 1, 32>}, {pipeline_mode = #tpu.pipeline_mode<synchronous>, transform_indices = @transform_8, window_bounds = array<i64: 32, 32>}, {pipeline_mode = #tpu.pipeline_mode<synchronous>, transform_indices = @transform_9, window_bounds = array<i64: 1, 32>}, {pipeline_mode = #tpu.pipeline_mode<synchronous>, transform_indices = @transform_10, window_bounds = array<i64: 1, 32>}, {pipeline_mode = #tpu.pipeline_mode<synchronous>, transform_indices = @transform_11, window_bounds = array<i64: 1, 32>}, {transform_indices = @transform_12, window_bounds = array<i64: 32, 64>}, {transform_indices = @transform_13, window_bounds = array<i64: 1, 64>}, {transform_indices = @transform_14, window_bounds = array<i64: 64, 32>}, {pipeline_mode = #tpu.pipeline_mode<synchronous>, transform_indices = @transform_15, window_bounds = array<i64: 1, 32>}, {pipeline_mode = #tpu.pipeline_mode<synchronous>, transform_indices = @transform_16, window_bounds = array<i64: 1, 32>}, {pipeline_mode = #tpu.pipeline_mode<synchronous>, transform_indices = @transform_17, window_bounds = array<i64: 1, 32>}, {transform_indices = @transform_18, window_bounds = array<i64: 1, 8, 32>}]} {
    %c0_i32 = arith.constant 0 : i32
    %0 = arith.cmpi eq, %arg1, %c0_i32 : i32
    %1 = arith.extui %0 : i1 to i32
    %c0_i32_0 = arith.constant 0 : i32
    %2 = arith.cmpi ne, %1, %c0_i32_0 : i32
    scf.if %2 {
      %c0_19 = arith.constant 0 : index
      %c0_20 = arith.constant 0 : index
      %c0_21 = arith.constant 0 : index
      %31 = vector.load %arg2[%c0_19, %c0_20, %c0_21] : memref<1x8x32xf32, #tpu.memory_space<vmem>>, vector<1x8x32xf32>
      %32 = vector.shape_cast %31 : vector<1x8x32xf32> to vector<8x32xf32>
      %33 = arith.truncf %32 : vector<8x32xf32> to vector<8x32xbf16>
      %c0_22 = arith.constant 0 : index
      %c0_23 = arith.constant 0 : index
      %34 = vector.load %arg4[%c0_22, %c0_23] : memref<32x32xbf16, #tpu.memory_space<vmem>>, vector<32x32xbf16>
      %cst_24 = arith.constant dense<0.000000e+00> : vector<8x32xf32>
      %35 = tpu.matmul %33, %34, %cst_24 {dimension_numbers = #tpu.dot_dimension_numbers<[1], [0], [0], [1], [0, 0, 1, 1], [], []>} : vector<8x32xbf16>, vector<32x32xbf16>, vector<8x32xf32> -> vector<8x32xf32>
      %c0_25 = arith.constant 0 : index
      %c0_26 = arith.constant 0 : index
      %36 = vector.load %arg5[%c0_25, %c0_26] : memref<1x32xf32, #tpu.memory_space<vmem>>, vector<1x32xf32>
      %37 = vector.broadcast %36 : vector<1x32xf32> to vector<8x32xf32>
      %38 = arith.addf %35, %37 : vector<8x32xf32>
      %c0_27 = arith.constant 0 : index
      %c0_28 = arith.constant 0 : index
      %39 = vector.load %arg6[%c0_27, %c0_28] : memref<32x32xbf16, #tpu.memory_space<vmem>>, vector<32x32xbf16>
      %cst_29 = arith.constant dense<0.000000e+00> : vector<8x32xf32>
      %40 = tpu.matmul %33, %39, %cst_29 {dimension_numbers = #tpu.dot_dimension_numbers<[1], [0], [0], [1], [0, 0, 1, 1], [], []>} : vector<8x32xbf16>, vector<32x32xbf16>, vector<8x32xf32> -> vector<8x32xf32>
      %c0_30 = arith.constant 0 : index
      %c0_31 = arith.constant 0 : index
      %41 = vector.load %arg7[%c0_30, %c0_31] : memref<1x32xf32, #tpu.memory_space<vmem>>, vector<1x32xf32>
      %42 = vector.broadcast %41 : vector<1x32xf32> to vector<8x32xf32>
      %43 = arith.addf %40, %42 : vector<8x32xf32>
      %c0_32 = arith.constant 0 : index
      %c0_33 = arith.constant 0 : index
      %44 = vector.load %arg8[%c0_32, %c0_33] : memref<32x32xbf16, #tpu.memory_space<vmem>>, vector<32x32xbf16>
      %cst_34 = arith.constant dense<0.000000e+00> : vector<8x32xf32>
      %45 = tpu.matmul %33, %44, %cst_34 {dimension_numbers = #tpu.dot_dimension_numbers<[1], [0], [0], [1], [0, 0, 1, 1], [], []>} : vector<8x32xbf16>, vector<32x32xbf16>, vector<8x32xf32> -> vector<8x32xf32>
      %c0_35 = arith.constant 0 : index
      %c0_36 = arith.constant 0 : index
      %46 = vector.load %arg9[%c0_35, %c0_36] : memref<1x32xf32, #tpu.memory_space<vmem>>, vector<1x32xf32>
      %47 = vector.broadcast %46 : vector<1x32xf32> to vector<8x32xf32>
      %48 = arith.addf %45, %47 : vector<8x32xf32>
      %49 = vector.extract_strided_slice %38 {offsets = [0, 0], sizes = [8, 8], strides = [1, 1]} : vector<8x32xf32> to vector<8x8xf32>
      %50 = arith.truncf %49 : vector<8x8xf32> to vector<8x8xbf16>
      %c0_37 = arith.constant 0 : index
      %c0_38 = arith.constant 0 : index
      %c0_39 = arith.constant 0 : index
      %51 = vector.load %arg21[%c0_37, %c0_38, %c0_39] : memref<4x8x8xbf16, #tpu.memory_space<vmem>>, vector<1x8x8xbf16>
      %52 = vector.shape_cast %51 : vector<1x8x8xbf16> to vector<8x8xbf16>
      %53 = vector.shape_cast %50 : vector<8x8xbf16> to vector<1x8x8xbf16>
      tpu.vector_store %arg21[%c0_37, %c0_38, %c0_39], %53 {strides = array<i32>} : memref<4x8x8xbf16, #tpu.memory_space<vmem>>, vector<1x8x8xbf16>,
      %54 = vector.extract_strided_slice %43 {offsets = [0, 0], sizes = [8, 8], strides = [1, 1]} : vector<8x32xf32> to vector<8x8xf32>
      %55 = arith.truncf %54 : vector<8x8xf32> to vector<8x8xbf16>
      %c0_40 = arith.constant 0 : index
      %c0_41 = arith.constant 0 : index
      %c0_42 = arith.constant 0 : index
      %56 = vector.load %arg22[%c0_40, %c0_41, %c0_42] : memref<4x8x8xbf16, #tpu.memory_space<vmem>>, vector<1x8x8xbf16>
      %57 = vector.shape_cast %56 : vector<1x8x8xbf16> to vector<8x8xbf16>
      %58 = vector.shape_cast %55 : vector<8x8xbf16> to vector<1x8x8xbf16>
      tpu.vector_store %arg22[%c0_40, %c0_41, %c0_42], %58 {strides = array<i32>} : memref<4x8x8xbf16, #tpu.memory_space<vmem>>, vector<1x8x8xbf16>,
      %59 = vector.extract_strided_slice %48 {offsets = [0, 0], sizes = [8, 8], strides = [1, 1]} : vector<8x32xf32> to vector<8x8xf32>
      %60 = arith.truncf %59 : vector<8x8xf32> to vector<8x8xbf16>
      %c0_43 = arith.constant 0 : index
      %c0_44 = arith.constant 0 : index
      %c0_45 = arith.constant 0 : index
      %61 = vector.load %arg23[%c0_43, %c0_44, %c0_45] : memref<4x8x8xbf16, #tpu.memory_space<vmem>>, vector<1x8x8xbf16>
      %62 = vector.shape_cast %61 : vector<1x8x8xbf16> to vector<8x8xbf16>
      %63 = vector.shape_cast %60 : vector<8x8xbf16> to vector<1x8x8xbf16>
      tpu.vector_store %arg23[%c0_43, %c0_44, %c0_45], %63 {strides = array<i32>} : memref<4x8x8xbf16, #tpu.memory_space<vmem>>, vector<1x8x8xbf16>,
      %64 = vector.extract_strided_slice %38 {offsets = [0, 8], sizes = [8, 8], strides = [1, 1]} : vector<8x32xf32> to vector<8x8xf32>
      %65 = arith.truncf %64 : vector<8x8xf32> to vector<8x8xbf16>
      %c1 = arith.constant 1 : index
      %c0_46 = arith.constant 0 : index
      %c0_47 = arith.constant 0 : index
      %66 = vector.load %arg21[%c1, %c0_46, %c0_47] : memref<4x8x8xbf16, #tpu.memory_space<vmem>>, vector<1x8x8xbf16>
      %67 = vector.shape_cast %66 : vector<1x8x8xbf16> to vector<8x8xbf16>
      %68 = vector.shape_cast %65 : vector<8x8xbf16> to vector<1x8x8xbf16>
      tpu.vector_store %arg21[%c1, %c0_46, %c0_47], %68 {strides = array<i32>} : memref<4x8x8xbf16, #tpu.memory_space<vmem>>, vector<1x8x8xbf16>,
      %69 = vector.extract_strided_slice %43 {offsets = [0, 8], sizes = [8, 8], strides = [1, 1]} : vector<8x32xf32> to vector<8x8xf32>
      %70 = arith.truncf %69 : vector<8x8xf32> to vector<8x8xbf16>
      %c1_48 = arith.constant 1 : index
      %c0_49 = arith.constant 0 : index
      %c0_50 = arith.constant 0 : index
      %71 = vector.load %arg22[%c1_48, %c0_49, %c0_50] : memref<4x8x8xbf16, #tpu.memory_space<vmem>>, vector<1x8x8xbf16>
      %72 = vector.shape_cast %71 : vector<1x8x8xbf16> to vector<8x8xbf16>
      %73 = vector.shape_cast %70 : vector<8x8xbf16> to vector<1x8x8xbf16>
      tpu.vector_store %arg22[%c1_48, %c0_49, %c0_50], %73 {strides = array<i32>} : memref<4x8x8xbf16, #tpu.memory_space<vmem>>, vector<1x8x8xbf16>,
      %74 = vector.extract_strided_slice %48 {offsets = [0, 8], sizes = [8, 8], strides = [1, 1]} : vector<8x32xf32> to vector<8x8xf32>
      %75 = arith.truncf %74 : vector<8x8xf32> to vector<8x8xbf16>
      %c1_51 = arith.constant 1 : index
      %c0_52 = arith.constant 0 : index
      %c0_53 = arith.constant 0 : index
      %76 = vector.load %arg23[%c1_51, %c0_52, %c0_53] : memref<4x8x8xbf16, #tpu.memory_space<vmem>>, vector<1x8x8xbf16>
      %77 = vector.shape_cast %76 : vector<1x8x8xbf16> to vector<8x8xbf16>
      %78 = vector.shape_cast %75 : vector<8x8xbf16> to vector<1x8x8xbf16>
      tpu.vector_store %arg23[%c1_51, %c0_52, %c0_53], %78 {strides = array<i32>} : memref<4x8x8xbf16, #tpu.memory_space<vmem>>, vector<1x8x8xbf16>,
      %79 = vector.extract_strided_slice %38 {offsets = [0, 16], sizes = [8, 8], strides = [1, 1]} : vector<8x32xf32> to vector<8x8xf32>
      %80 = arith.truncf %79 : vector<8x8xf32> to vector<8x8xbf16>
      %c2 = arith.constant 2 : index
      %c0_54 = arith.constant 0 : index
      %c0_55 = arith.constant 0 : index
      %81 = vector.load %arg21[%c2, %c0_54, %c0_55] : memref<4x8x8xbf16, #tpu.memory_space<vmem>>, vector<1x8x8xbf16>
      %82 = vector.shape_cast %81 : vector<1x8x8xbf16> to vector<8x8xbf16>
      %83 = vector.shape_cast %80 : vector<8x8xbf16> to vector<1x8x8xbf16>
      tpu.vector_store %arg21[%c2, %c0_54, %c0_55], %83 {strides = array<i32>} : memref<4x8x8xbf16, #tpu.memory_space<vmem>>, vector<1x8x8xbf16>,
      %84 = vector.extract_strided_slice %43 {offsets = [0, 16], sizes = [8, 8], strides = [1, 1]} : vector<8x32xf32> to vector<8x8xf32>
      %85 = arith.truncf %84 : vector<8x8xf32> to vector<8x8xbf16>
      %c2_56 = arith.constant 2 : index
      %c0_57 = arith.constant 0 : index
      %c0_58 = arith.constant 0 : index
      %86 = vector.load %arg22[%c2_56, %c0_57, %c0_58] : memref<4x8x8xbf16, #tpu.memory_space<vmem>>, vector<1x8x8xbf16>
      %87 = vector.shape_cast %86 : vector<1x8x8xbf16> to vector<8x8xbf16>
      %88 = vector.shape_cast %85 : vector<8x8xbf16> to vector<1x8x8xbf16>
      tpu.vector_store %arg22[%c2_56, %c0_57, %c0_58], %88 {strides = array<i32>} : memref<4x8x8xbf16, #tpu.memory_space<vmem>>, vector<1x8x8xbf16>,
      %89 = vector.extract_strided_slice %48 {offsets = [0, 16], sizes = [8, 8], strides = [1, 1]} : vector<8x32xf32> to vector<8x8xf32>
      %90 = arith.truncf %89 : vector<8x8xf32> to vector<8x8xbf16>
      %c2_59 = arith.constant 2 : index
      %c0_60 = arith.constant 0 : index
      %c0_61 = arith.constant 0 : index
      %91 = vector.load %arg23[%c2_59, %c0_60, %c0_61] : memref<4x8x8xbf16, #tpu.memory_space<vmem>>, vector<1x8x8xbf16>
      %92 = vector.shape_cast %91 : vector<1x8x8xbf16> to vector<8x8xbf16>
      %93 = vector.shape_cast %90 : vector<8x8xbf16> to vector<1x8x8xbf16>
      tpu.vector_store %arg23[%c2_59, %c0_60, %c0_61], %93 {strides = array<i32>} : memref<4x8x8xbf16, #tpu.memory_space<vmem>>, vector<1x8x8xbf16>,
      %94 = vector.extract_strided_slice %38 {offsets = [0, 24], sizes = [8, 8], strides = [1, 1]} : vector<8x32xf32> to vector<8x8xf32>
      %95 = arith.truncf %94 : vector<8x8xf32> to vector<8x8xbf16>
      %c3 = arith.constant 3 : index
      %c0_62 = arith.constant 0 : index
      %c0_63 = arith.constant 0 : index
      %96 = vector.load %arg21[%c3, %c0_62, %c0_63] : memref<4x8x8xbf16, #tpu.memory_space<vmem>>, vector<1x8x8xbf16>
      %97 = vector.shape_cast %96 : vector<1x8x8xbf16> to vector<8x8xbf16>
      %98 = vector.shape_cast %95 : vector<8x8xbf16> to vector<1x8x8xbf16>
      tpu.vector_store %arg21[%c3, %c0_62, %c0_63], %98 {strides = array<i32>} : memref<4x8x8xbf16, #tpu.memory_space<vmem>>, vector<1x8x8xbf16>,
      %99 = vector.extract_strided_slice %43 {offsets = [0, 24], sizes = [8, 8], strides = [1, 1]} : vector<8x32xf32> to vector<8x8xf32>
      %100 = arith.truncf %99 : vector<8x8xf32> to vector<8x8xbf16>
      %c3_64 = arith.constant 3 : index
      %c0_65 = arith.constant 0 : index
      %c0_66 = arith.constant 0 : index
      %101 = vector.load %arg22[%c3_64, %c0_65, %c0_66] : memref<4x8x8xbf16, #tpu.memory_space<vmem>>, vector<1x8x8xbf16>
      %102 = vector.shape_cast %101 : vector<1x8x8xbf16> to vector<8x8xbf16>
      %103 = vector.shape_cast %100 : vector<8x8xbf16> to vector<1x8x8xbf16>
      tpu.vector_store %arg22[%c3_64, %c0_65, %c0_66], %103 {strides = array<i32>} : memref<4x8x8xbf16, #tpu.memory_space<vmem>>, vector<1x8x8xbf16>,
      %104 = vector.extract_strided_slice %48 {offsets = [0, 24], sizes = [8, 8], strides = [1, 1]} : vector<8x32xf32> to vector<8x8xf32>
      %105 = arith.truncf %104 : vector<8x8xf32> to vector<8x8xbf16>
      %c3_67 = arith.constant 3 : index
      %c0_68 = arith.constant 0 : index
      %c0_69 = arith.constant 0 : index
      %106 = vector.load %arg23[%c3_67, %c0_68, %c0_69] : memref<4x8x8xbf16, #tpu.memory_space<vmem>>, vector<1x8x8xbf16>
      %107 = vector.shape_cast %106 : vector<1x8x8xbf16> to vector<8x8xbf16>
      %108 = vector.shape_cast %105 : vector<8x8xbf16> to vector<1x8x8xbf16>
      tpu.vector_store %arg23[%c3_67, %c0_68, %c0_69], %108 {strides = array<i32>} : memref<4x8x8xbf16, #tpu.memory_space<vmem>>, vector<1x8x8xbf16>,
      %c0_70 = arith.constant 0 : index
      %c0_71 = arith.constant 0 : index
      %c0_72 = arith.constant 0 : index
      %109 = vector.load %arg21[%c0_70, %c0_71, %c0_72] : memref<4x8x8xbf16, #tpu.memory_space<vmem>>, vector<4x8x8xbf16>
      %c0_73 = arith.constant 0 : index
      %c0_74 = arith.constant 0 : index
      %c0_75 = arith.constant 0 : index
      %110 = vector.load %arg22[%c0_73, %c0_74, %c0_75] : memref<4x8x8xbf16, #tpu.memory_space<vmem>>, vector<4x8x8xbf16>
      %c0_76 = arith.constant 0 : index
      %c0_77 = arith.constant 0 : index
      %c0_78 = arith.constant 0 : index
      %111 = vector.load %arg23[%c0_76, %c0_77, %c0_78] : memref<4x8x8xbf16, #tpu.memory_space<vmem>>, vector<4x8x8xbf16>
      "tpu.trace_start"() <{level = 10 : i32, message = "hqd,hkd->hqk"}> : () -> ()
      %cst_79 = arith.constant dense<0.000000e+00> : vector<4x8x8xf32>
      %112 = tpu.matmul %109, %110, %cst_79 {dimension_numbers = #tpu.dot_dimension_numbers<[2], [2], [1], [1], [0, 0, 0, 1, 1, 1], [0], [0]>} : vector<4x8x8xbf16>, vector<4x8x8xbf16>, vector<4x8x8xf32> -> vector<4x8x8xf32>
      "tpu.trace_stop"() : () -> ()
      %c0_80 = arith.constant 0 : index
      %c0_81 = arith.constant 0 : index
      %c0_82 = arith.constant 0 : index
      %113 = vector.load %arg3[%c0_80, %c0_81, %c0_82] : memref<1x1x8xf32, #tpu.memory_space<vmem>>, vector<1x1x8xf32>
      %114 = vector.broadcast %113 : vector<1x1x8xf32> to vector<4x8x8xf32>
      %115 = arith.addf %112, %114 : vector<4x8x8xf32>
      %cst_83 = arith.constant dense<0xFF800000> : vector<4x8xf32>
      %116 = vector.multi_reduction <maximumf>, %115, %cst_83 [2] : vector<4x8x8xf32> to vector<4x8xf32>
      %117 = vector.shape_cast %116 : vector<4x8xf32> to vector<4x8x1xf32>
      %118 = vector.broadcast %117 : vector<4x8x1xf32> to vector<4x8x8xf32>
      %119 = arith.subf %115, %118 : vector<4x8x8xf32>
      %120 = math.exp %119 : vector<4x8x8xf32>
      %cst_84 = arith.constant dense<0.000000e+00> : vector<4x8xf32>
      %121 = vector.multi_reduction <add>, %120, %cst_84 [2] : vector<4x8x8xf32> to vector<4x8xf32>
      %122 = vector.shape_cast %121 : vector<4x8xf32> to vector<4x8x1xf32>
      %123 = tpu.reciprocal %122 {approx = true} : vector<4x8x1xf32> -> vector<4x8x1xf32>
      %124 = vector.broadcast %123 : vector<4x8x1xf32> to vector<4x8x8xf32>
      %125 = arith.mulf %120, %124 : vector<4x8x8xf32>
      %126 = arith.truncf %125 : vector<4x8x8xf32> to vector<4x8x8xbf16>
      "tpu.trace_start"() <{level = 10 : i32, message = "hqk,hkd->hqd"}> : () -> ()
      %cst_85 = arith.constant dense<0.000000e+00> : vector<4x8x8xf32>
      %127 = tpu.matmul %126, %111, %cst_85 {dimension_numbers = #tpu.dot_dimension_numbers<[2], [1], [1], [2], [0, 0, 0, 1, 1, 2], [0], [0]>} : vector<4x8x8xbf16>, vector<4x8x8xbf16>, vector<4x8x8xf32> -> vector<4x8x8xf32>
      "tpu.trace_stop"() : () -> ()
      %128 = vector.extract_strided_slice %127 {offsets = [0, 0, 0], sizes = [1, 8, 8], strides = [1, 1, 1]} : vector<4x8x8xf32> to vector<1x8x8xf32>
      %129 = vector.shape_cast %128 : vector<1x8x8xf32> to vector<8x8xf32>
      %130 = arith.truncf %129 : vector<8x8xf32> to vector<8x8xbf16>
      %c0_86 = arith.constant 0 : index
      %c0_87 = arith.constant 0 : index
      %131 = vector.load %arg24[%c0_86, %c0_87] : memref<8x32xbf16, #tpu.memory_space<vmem>>, vector<8x8xbf16>
      tpu.vector_store %arg24[%c0_86, %c0_87], %130 {strides = array<i32>} : memref<8x32xbf16, #tpu.memory_space<vmem>>, vector<8x8xbf16>,
      %132 = vector.extract_strided_slice %127 {offsets = [1, 0, 0], sizes = [1, 8, 8], strides = [1, 1, 1]} : vector<4x8x8xf32> to vector<1x8x8xf32>
      %133 = vector.shape_cast %132 : vector<1x8x8xf32> to vector<8x8xf32>
      %134 = arith.truncf %133 : vector<8x8xf32> to vector<8x8xbf16>
      %c0_88 = arith.constant 0 : index
      %c8 = arith.constant 8 : index
      %135 = vector.load %arg24[%c0_88, %c8] : memref<8x32xbf16, #tpu.memory_space<vmem>>, vector<8x8xbf16>
      tpu.vector_store %arg24[%c0_88, %c8], %134 {strides = array<i32>} : memref<8x32xbf16, #tpu.memory_space<vmem>>, vector<8x8xbf16>,
      %136 = vector.extract_strided_slice %127 {offsets = [2, 0, 0], sizes = [1, 8, 8], strides = [1, 1, 1]} : vector<4x8x8xf32> to vector<1x8x8xf32>
      %137 = vector.shape_cast %136 : vector<1x8x8xf32> to vector<8x8xf32>
      %138 = arith.truncf %137 : vector<8x8xf32> to vector<8x8xbf16>
      %c0_89 = arith.constant 0 : index
      %c16 = arith.constant 16 : index
      %139 = vector.load %arg24[%c0_89, %c16] : memref<8x32xbf16, #tpu.memory_space<vmem>>, vector<8x8xbf16>
      tpu.vector_store %arg24[%c0_89, %c16], %138 {strides = array<i32>} : memref<8x32xbf16, #tpu.memory_space<vmem>>, vector<8x8xbf16>,
      %140 = vector.extract_strided_slice %127 {offsets = [3, 0, 0], sizes = [1, 8, 8], strides = [1, 1, 1]} : vector<4x8x8xf32> to vector<1x8x8xf32>
      %141 = vector.shape_cast %140 : vector<1x8x8xf32> to vector<8x8xf32>
      %142 = arith.truncf %141 : vector<8x8xf32> to vector<8x8xbf16>
      %c0_90 = arith.constant 0 : index
      %c24 = arith.constant 24 : index
      %143 = vector.load %arg24[%c0_90, %c24] : memref<8x32xbf16, #tpu.memory_space<vmem>>, vector<8x8xbf16>
      tpu.vector_store %arg24[%c0_90, %c24], %142 {strides = array<i32>} : memref<8x32xbf16, #tpu.memory_space<vmem>>, vector<8x8xbf16>,
      %c0_91 = arith.constant 0 : index
      %c0_92 = arith.constant 0 : index
      %144 = vector.load %arg24[%c0_91, %c0_92] : memref<8x32xbf16, #tpu.memory_space<vmem>>, vector<8x32xbf16>
      %c0_93 = arith.constant 0 : index
      %c0_94 = arith.constant 0 : index
      %145 = vector.load %arg10[%c0_93, %c0_94] : memref<32x32xbf16, #tpu.memory_space<vmem>>, vector<32x32xbf16>
      %cst_95 = arith.constant dense<0.000000e+00> : vector<8x32xf32>
      %146 = tpu.matmul %144, %145, %cst_95 {dimension_numbers = #tpu.dot_dimension_numbers<[1], [0], [0], [1], [0, 0, 1, 1], [], []>} : vector<8x32xbf16>, vector<32x32xbf16>, vector<8x32xf32> -> vector<8x32xf32>
      %c0_96 = arith.constant 0 : index
      %c0_97 = arith.constant 0 : index
      %147 = vector.load %arg11[%c0_96, %c0_97] : memref<1x32xf32, #tpu.memory_space<vmem>>, vector<1x32xf32>
      %148 = vector.broadcast %147 : vector<1x32xf32> to vector<8x32xf32>
      %149 = arith.addf %146, %148 : vector<8x32xf32>
      %150 = arith.addf %32, %149 : vector<8x32xf32>
      %c0_98 = arith.constant 0 : index
      %c0_99 = arith.constant 0 : index
      %151 = vector.load %arg12[%c0_98, %c0_99] : memref<1x32xf32, #tpu.memory_space<vmem>>, vector<1x32xf32>
      %c0_100 = arith.constant 0 : index
      %c0_101 = arith.constant 0 : index
      %152 = vector.load %arg13[%c0_100, %c0_101] : memref<1x32xf32, #tpu.memory_space<vmem>>, vector<1x32xf32>
      %cst_102 = arith.constant dense<0.000000e+00> : vector<8xf32>
      %153 = vector.multi_reduction <add>, %150, %cst_102 [1] : vector<8x32xf32> to vector<8xf32>
      %154 = vector.shape_cast %153 : vector<8xf32> to vector<8x1xf32>
      %cst_103 = arith.constant 3.200000e+01 : f32
      %155 = vector.broadcast %cst_103 : f32 to vector<8x1xf32>
      %156 = arith.divf %154, %155 : vector<8x1xf32>
      %157 = vector.broadcast %156 : vector<8x1xf32> to vector<8x32xf32>
      %158 = arith.subf %150, %157 : vector<8x32xf32>
      %159 = arith.mulf %158, %158 : vector<8x32xf32>
      %cst_104 = arith.constant dense<0.000000e+00> : vector<8xf32>
      %160 = vector.multi_reduction <add>, %159, %cst_104 [1] : vector<8x32xf32> to vector<8xf32>
      %161 = vector.shape_cast %160 : vector<8xf32> to vector<8x1xf32>
      %cst_105 = arith.constant 3.200000e+01 : f32
      %162 = vector.broadcast %cst_105 : f32 to vector<8x1xf32>
      %163 = arith.divf %161, %162 : vector<8x1xf32>
      %cst_106 = arith.constant 9.99999996E-13 : f32
      %164 = vector.broadcast %cst_106 : f32 to vector<8x1xf32>
      %165 = arith.addf %163, %164 : vector<8x1xf32>
      %166 = math.rsqrt %165 : vector<8x1xf32>
      %167 = vector.broadcast %166 : vector<8x1xf32> to vector<8x32xf32>
      %168 = arith.mulf %158, %167 : vector<8x32xf32>
      %169 = vector.broadcast %151 : vector<1x32xf32> to vector<8x32xf32>
      %170 = arith.mulf %168, %169 : vector<8x32xf32>
      %171 = vector.broadcast %152 : vector<1x32xf32> to vector<8x32xf32>
      %172 = arith.addf %170, %171 : vector<8x32xf32>
      %c0_107 = arith.constant 0 : index
      %c0_108 = arith.constant 0 : index
      %173 = vector.load %arg25[%c0_107, %c0_108] : memref<8x32xf32, #tpu.memory_space<vmem>>, vector<8x32xf32>
      tpu.vector_store %arg25[%c0_107, %c0_108], %172 {strides = array<i32>} : memref<8x32xf32, #tpu.memory_space<vmem>>, vector<8x32xf32>,
      %174 = arith.truncf %172 : vector<8x32xf32> to vector<8x32xbf16>
      %c0_109 = arith.constant 0 : index
      %c0_110 = arith.constant 0 : index
      %175 = vector.load %arg24[%c0_109, %c0_110] : memref<8x32xbf16, #tpu.memory_space<vmem>>, vector<8x32xbf16>
      tpu.vector_store %arg24[%c0_109, %c0_110], %174 {strides = array<i32>} : memref<8x32xbf16, #tpu.memory_space<vmem>>, vector<8x32xbf16>,
      %cst_111 = arith.constant 0.000000e+00 : f32
      %176 = vector.broadcast %cst_111 : f32 to vector<8x32xf32>
      %c0_112 = arith.constant 0 : index
      %c0_113 = arith.constant 0 : index
      %177 = vector.load %arg26[%c0_112, %c0_113] : memref<8x32xf32, #tpu.memory_space<vmem>>, vector<8x32xf32>
      tpu.vector_store %arg26[%c0_112, %c0_113], %176 {strides = array<i32>} : memref<8x32xf32, #tpu.memory_space<vmem>>, vector<8x32xf32>,
    } else {
    }
    %c0 = arith.constant 0 : index
    %c0_1 = arith.constant 0 : index
    %3 = vector.load %arg24[%c0, %c0_1] : memref<8x32xbf16, #tpu.memory_space<vmem>>, vector<8x32xbf16>
    %c0_2 = arith.constant 0 : index
    %c0_3 = arith.constant 0 : index
    %4 = vector.load %arg14[%c0_2, %c0_3] : memref<32x64xbf16, #tpu.memory_space<vmem>>, vector<32x64xbf16>
    %cst = arith.constant dense<0.000000e+00> : vector<8x64xf32>
    %5 = tpu.matmul %3, %4, %cst {dimension_numbers = #tpu.dot_dimension_numbers<[1], [0], [0], [1], [0, 0, 1, 1], [], []>} : vector<8x32xbf16>, vector<32x64xbf16>, vector<8x64xf32> -> vector<8x64xf32>
    %c0_4 = arith.constant 0 : index
    %c0_5 = arith.constant 0 : index
    %6 = vector.load %arg15[%c0_4, %c0_5] : memref<1x64xf32, #tpu.memory_space<vmem>>, vector<1x64xf32>
    %7 = vector.broadcast %6 : vector<1x64xf32> to vector<8x64xf32>
    %8 = arith.addf %5, %7 : vector<8x64xf32>
    %cst_6 = arith.constant 5.000000e-01 : f32
    %9 = vector.broadcast %cst_6 : f32 to vector<8x64xf32>
    %10 = arith.mulf %9, %8 : vector<8x64xf32>
    %cst_7 = arith.constant 4.471500e-02 : f32
    %11 = vector.broadcast %cst_7 : f32 to vector<8x64xf32>
    %12 = arith.mulf %11, %8 : vector<8x64xf32>
    %13 = arith.mulf %12, %8 : vector<8x64xf32>
    %14 = arith.mulf %13, %8 : vector<8x64xf32>
    %15 = arith.addf %8, %14 : vector<8x64xf32>
    %cst_8 = arith.constant 0.797884583 : f32
    %16 = vector.broadcast %cst_8 : f32 to vector<8x64xf32>
    %17 = arith.mulf %16, %15 : vector<8x64xf32>
    %18 = math.tanh %17 : vector<8x64xf32>
    %cst_9 = arith.constant 1.000000e+00 : f32
    %19 = vector.broadcast %cst_9 : f32 to vector<8x64xf32>
    %20 = arith.addf %19, %18 : vector<8x64xf32>
    %21 = arith.mulf %10, %20 : vector<8x64xf32>
    %c0_10 = arith.constant 0 : index
    %c0_11 = arith.constant 0 : index
    %22 = vector.load %arg26[%c0_10, %c0_11] : memref<8x32xf32, #tpu.memory_space<vmem>>, vector<8x32xf32>
    %23 = arith.truncf %21 : vector<8x64xf32> to vector<8x64xbf16>
    %c0_12 = arith.constant 0 : index
    %c0_13 = arith.constant 0 : index
    %24 = vector.load %arg16[%c0_12, %c0_13] : memref<64x32xbf16, #tpu.memory_space<vmem>>, vector<64x32xbf16>
    %cst_14 = arith.constant dense<0.000000e+00> : vector<8x32xf32>
    %25 = tpu.matmul %23, %24, %cst_14 {dimension_numbers = #tpu.dot_dimension_numbers<[1], [0], [0], [1], [0, 0, 1, 1], [], []>} : vector<8x64xbf16>, vector<64x32xbf16>, vector<8x32xf32> -> vector<8x32xf32>
    %26 = arith.addf %22, %25 : vector<8x32xf32>
    %c0_15 = arith.constant 0 : index
    %c0_16 = arith.constant 0 : index
    %27 = vector.load %arg26[%c0_15, %c0_16] : memref<8x32xf32, #tpu.memory_space<vmem>>, vector<8x32xf32>
    tpu.vector_store %arg26[%c0_15, %c0_16], %26 {strides = array<i32>} : memref<8x32xf32, #tpu.memory_space<vmem>>, vector<8x32xf32>,
    %c0_i32_17 = arith.constant 0 : i32
    %28 = arith.cmpi eq, %arg1, %c0_i32_17 : i32
    %29 = arith.extui %28 : i1 to i32
    %c0_i32_18 = arith.constant 0 : i32
    %30 = arith.cmpi ne, %29, %c0_i32_18 : i32
    scf.if %30 {
      %c0_19 = arith.constant 0 : index
      %c0_20 = arith.constant 0 : index
      %31 = vector.load %arg26[%c0_19, %c0_20] : memref<8x32xf32, #tpu.memory_space<vmem>>, vector<8x32xf32>
      %c0_21 = arith.constant 0 : index
      %c0_22 = arith.constant 0 : index
      %32 = vector.load %arg17[%c0_21, %c0_22] : memref<1x32xf32, #tpu.memory_space<vmem>>, vector<1x32xf32>
      %33 = vector.broadcast %32 : vector<1x32xf32> to vector<8x32xf32>
      %34 = arith.addf %31, %33 : vector<8x32xf32>
      %c0_23 = arith.constant 0 : index
      %c0_24 = arith.constant 0 : index
      %35 = vector.load %arg25[%c0_23, %c0_24] : memref<8x32xf32, #tpu.memory_space<vmem>>, vector<8x32xf32>
      %36 = arith.addf %34, %35 : vector<8x32xf32>
      %c0_25 = arith.constant 0 : index
      %c0_26 = arith.constant 0 : index
      %37 = vector.load %arg18[%c0_25, %c0_26] : memref<1x32xf32, #tpu.memory_space<vmem>>, vector<1x32xf32>
      %c0_27 = arith.constant 0 : index
      %c0_28 = arith.constant 0 : index
      %38 = vector.load %arg19[%c0_27, %c0_28] : memref<1x32xf32, #tpu.memory_space<vmem>>, vector<1x32xf32>
      %cst_29 = arith.constant dense<0.000000e+00> : vector<8xf32>
      %39 = vector.multi_reduction <add>, %36, %cst_29 [1] : vector<8x32xf32> to vector<8xf32>
      %40 = vector.shape_cast %39 : vector<8xf32> to vector<8x1xf32>
      %cst_30 = arith.constant 3.200000e+01 : f32
      %41 = vector.broadcast %cst_30 : f32 to vector<8x1xf32>
      %42 = arith.divf %40, %41 : vector<8x1xf32>
      %43 = vector.broadcast %42 : vector<8x1xf32> to vector<8x32xf32>
      %44 = arith.subf %36, %43 : vector<8x32xf32>
      %45 = arith.mulf %44, %44 : vector<8x32xf32>
      %cst_31 = arith.constant dense<0.000000e+00> : vector<8xf32>
      %46 = vector.multi_reduction <add>, %45, %cst_31 [1] : vector<8x32xf32> to vector<8xf32>
      %47 = vector.shape_cast %46 : vector<8xf32> to vector<8x1xf32>
      %cst_32 = arith.constant 3.200000e+01 : f32
      %48 = vector.broadcast %cst_32 : f32 to vector<8x1xf32>
      %49 = arith.divf %47, %48 : vector<8x1xf32>
      %cst_33 = arith.constant 9.99999996E-13 : f32
      %50 = vector.broadcast %cst_33 : f32 to vector<8x1xf32>
      %51 = arith.addf %49, %50 : vector<8x1xf32>
      %52 = math.rsqrt %51 : vector<8x1xf32>
      %53 = vector.broadcast %52 : vector<8x1xf32> to vector<8x32xf32>
      %54 = arith.mulf %44, %53 : vector<8x32xf32>
      %55 = vector.broadcast %37 : vector<1x32xf32> to vector<8x32xf32>
      %56 = arith.mulf %54, %55 : vector<8x32xf32>
      %57 = vector.broadcast %38 : vector<1x32xf32> to vector<8x32xf32>
      %58 = arith.addf %56, %57 : vector<8x32xf32>
      %c0_34 = arith.constant 0 : index
      %c0_35 = arith.constant 0 : index
      %c0_36 = arith.constant 0 : index
      %59 = vector.load %arg20[%c0_34, %c0_35, %c0_36] : memref<1x8x32xf32, #tpu.memory_space<vmem>>, vector<1x8x32xf32>
      %60 = vector.shape_cast %59 : vector<1x8x32xf32> to vector<8x32xf32>
      %61 = vector.shape_cast %58 : vector<8x32xf32> to vector<1x8x32xf32>
      tpu.vector_store %arg20[%c0_34, %c0_35, %c0_36], %61 {strides = array<i32>} : memref<1x8x32xf32, #tpu.memory_space<vmem>>, vector<1x8x32xf32>,
    } else {
    }
    return
  }
  func.func @transform_0(%arg0: i32, %arg1: i32) -> (i32, i32, i32) {
    %c0_i32 = arith.constant 0 : i32
    %c0_i32_0 = arith.constant 0 : i32
    %c0_i32_1 = arith.constant 0 : i32
    return %arg0, %c0_i32, %c0_i32_0 : i32, i32, i32
  }
  func.func @transform_1(%arg0: i32, %arg1: i32) -> (i32, i32, i32) {
    %c0_i32 = arith.constant 0 : i32
    %c0_i32_0 = arith.constant 0 : i32
    %c0_i32_1 = arith.constant 0 : i32
    return %arg0, %c0_i32, %c0_i32_0 : i32, i32, i32
  }
  func.func @transform_2(%arg0: i32, %arg1: i32) -> (i32, i32) {
    %c0_i32 = arith.constant 0 : i32
    %c0_i32_0 = arith.constant 0 : i32
    %c0_i32_1 = arith.constant 0 : i32
    return %c0_i32, %c0_i32_0 : i32, i32
  }
  func.func @transform_3(%arg0: i32, %arg1: i32) -> (i32, i32) {
    %c0_i32 = arith.constant 0 : i32
    %c0_i32_0 = arith.constant 0 : i32
    %c0_i32_1 = arith.constant 0 : i32
    return %c0_i32, %c0_i32_0 : i32, i32
  }
  func.func @transform_4(%arg0: i32, %arg1: i32) -> (i32, i32) {
    %c0_i32 = arith.constant 0 : i32
    %c0_i32_0 = arith.constant 0 : i32
    %c0_i32_1 = arith.constant 0 : i32
    return %c0_i32, %c0_i32_0 : i32, i32
  }
  func.func @transform_5(%arg0: i32, %arg1: i32) -> (i32, i32) {
    %c0_i32 = arith.constant 0 : i32
    %c0_i32_0 = arith.constant 0 : i32
    %c0_i32_1 = arith.constant 0 : i32
    return %c0_i32, %c0_i32_0 : i32, i32
  }
  func.func @transform_6(%arg0: i32, %arg1: i32) -> (i32, i32) {
    %c0_i32 = arith.constant 0 : i32
    %c0_i32_0 = arith.constant 0 : i32
    %c0_i32_1 = arith.constant 0 : i32
    return %c0_i32, %c0_i32_0 : i32, i32
  }
  func.func @transform_7(%arg0: i32, %arg1: i32) -> (i32, i32) {
    %c0_i32 = arith.constant 0 : i32
    %c0_i32_0 = arith.constant 0 : i32
    %c0_i32_1 = arith.constant 0 : i32
    return %c0_i32, %c0_i32_0 : i32, i32
  }
  func.func @transform_8(%arg0: i32, %arg1: i32) -> (i32, i32) {
    %c0_i32 = arith.constant 0 : i32
    %c0_i32_0 = arith.constant 0 : i32
    %c0_i32_1 = arith.constant 0 : i32
    return %c0_i32, %c0_i32_0 : i32, i32
  }
  func.func @transform_9(%arg0: i32, %arg1: i32) -> (i32, i32) {
    %c0_i32 = arith.constant 0 : i32
    %c0_i32_0 = arith.constant 0 : i32
    %c0_i32_1 = arith.constant 0 : i32
    return %c0_i32, %c0_i32_0 : i32, i32
  }
  func.func @transform_10(%arg0: i32, %arg1: i32) -> (i32, i32) {
    %c0_i32 = arith.constant 0 : i32
    %c0_i32_0 = arith.constant 0 : i32
    %c0_i32_1 = arith.constant 0 : i32
    return %c0_i32, %c0_i32_0 : i32, i32
  }
  func.func @transform_11(%arg0: i32, %arg1: i32) -> (i32, i32) {
    %c0_i32 = arith.constant 0 : i32
    %c0_i32_0 = arith.constant 0 : i32
    %c0_i32_1 = arith.constant 0 : i32
    return %c0_i32, %c0_i32_0 : i32, i32
  }
  func.func @transform_12(%arg0: i32, %arg1: i32) -> (i32, i32) {
    %c0_i32 = arith.constant 0 : i32
    %c0_i32_0 = arith.constant 0 : i32
    return %c0_i32, %arg1 : i32, i32
  }
  func.func @transform_13(%arg0: i32, %arg1: i32) -> (i32, i32) {
    %c0_i32 = arith.constant 0 : i32
    %c0_i32_0 = arith.constant 0 : i32
    return %c0_i32, %arg1 : i32, i32
  }
  func.func @transform_14(%arg0: i32, %arg1: i32) -> (i32, i32) {
    %c0_i32 = arith.constant 0 : i32
    %c0_i32_0 = arith.constant 0 : i32
    return %arg1, %c0_i32 : i32, i32
  }
  func.func @transform_15(%arg0: i32, %arg1: i32) -> (i32, i32) {
    %c0_i32 = arith.constant 0 : i32
    %c0_i32_0 = arith.constant 0 : i32
    %c0_i32_1 = arith.constant 0 : i32
    return %c0_i32, %c0_i32_0 : i32, i32
  }
  func.func @transform_16(%arg0: i32, %arg1: i32) -> (i32, i32) {
    %c0_i32 = arith.constant 0 : i32
    %c0_i32_0 = arith.constant 0 : i32
    %c0_i32_1 = arith.constant 0 : i32
    return %c0_i32, %c0_i32_0 : i32, i32
  }
  func.func @transform_17(%arg0: i32, %arg1: i32) -> (i32, i32) {
    %c0_i32 = arith.constant 0 : i32
    %c0_i32_0 = arith.constant 0 : i32
    %c0_i32_1 = arith.constant 0 : i32
    return %c0_i32, %c0_i32_0 : i32, i32
  }
  func.func @transform_18(%arg0: i32, %arg1: i32) -> (i32, i32, i32) {
    %c0_i32 = arith.constant 0 : i32
    %c0_i32_0 = arith.constant 0 : i32
    %c0_i32_1 = arith.constant 0 : i32
    return %arg0, %c0_i32, %c0_i32_0 : i32, i32, i32
  }
}

</mosaic_0001>

<llo_original>
// kernel: tpu_custom_call.1
$region0: #{tpu_custom_call.1}
  #allocation0 [shape = 'u32[]', space=smem, size = 0x4, offset = 0x4, fixed_abs, tag = 'smem constant byte address 0x4 - core index']
  #allocation1 [shape = 'u32[72,128]{1,0:T(1,128)}', space=vmem, size = 0x9000, scoped, tag = 'internal scratch']
  #allocation2 [shape = 'bf16[4,8,8]{2,1,0:T(8,128)(2,1)}', space=vmem, size = 0x2000, scoped, tag = 'scratch operand']
  #allocation3 [shape = 'bf16[4,8,8]{2,1,0:T(8,128)(2,1)}', space=vmem, size = 0x2000, scoped, tag = 'scratch operand']
  #allocation4 [shape = 'bf16[4,8,8]{2,1,0:T(8,128)(2,1)}', space=vmem, size = 0x2000, scoped, tag = 'scratch operand']
  #allocation5 [shape = 'bf16[8,32]{1,0:T(8,128)(2,1)}', space=vmem, size = 0x800, scoped, tag = 'scratch operand']
  #allocation6 [shape = 'f32[8,32]{1,0:T(8,128)}', space=vmem, size = 0x1000, scoped, tag = 'scratch operand']
  #allocation7 [shape = 'f32[8,32]{1,0:T(8,128)}', space=vmem, size = 0x1000, scoped, tag = 'scratch operand']
  %s0 = inlined_call_operand.vmem [shape: f32[2,8,32], index: 0, kind: input, shape index: {}]
  %s1 = inlined_call_operand.hbm [shape: f32[2,1,8], index: 1, kind: input, shape index: {}]
  %s2 = inlined_call_operand.vmem [shape: bf16[32,32], index: 2, kind: input, shape index: {}]
  %s3 = inlined_call_operand.vmem [shape: f32[1,32], index: 3, kind: input, shape index: {}]
  %s4 = inlined_call_operand.vmem [shape: bf16[32,32], index: 4, kind: input, shape index: {}]
  %s5 = inlined_call_operand.vmem [shape: f32[1,32], index: 5, kind: input, shape index: {}]
  %s6 = inlined_call_operand.hbm [shape: bf16[32,32], index: 6, kind: input, shape index: {}]
  %s7 = inlined_call_operand.vmem [shape: f32[1,32], index: 7, kind: input, shape index: {}]
  %s8 = inlined_call_operand.hbm [shape: bf16[32,32], index: 8, kind: input, shape index: {}]
  %s9 = inlined_call_operand.vmem [shape: f32[1,32], index: 9, kind: input, shape index: {}]
  %s10 = inlined_call_operand.vmem [shape: f32[1,32], index: 10, kind: input, shape index: {}]
  %s11 = inlined_call_operand.vmem [shape: f32[1,32], index: 11, kind: input, shape index: {}]
  %s12 = inlined_call_operand.hbm [shape: bf16[32,64], index: 12, kind: input, shape index: {}]
  %s13 = inlined_call_operand.vmem [shape: f32[1,64], index: 13, kind: input, shape index: {}]
  %s14 = inlined_call_operand.vmem [shape: bf16[64,32], index: 14, kind: input, shape index: {}]
  %s15 = inlined_call_operand.vmem [shape: f32[1,32], index: 15, kind: input, shape index: {}]
  %s16 = inlined_call_operand.vmem [shape: f32[1,32], index: 16, kind: input, shape index: {}]
  %s17 = inlined_call_operand.vmem [shape: f32[1,32], index: 17, kind: input, shape index: {}]
  %s18 = inlined_call_operand.hbm [shape: f32[2,8,32], index: 18, kind: output, shape index: {}]
  %s19 = sld [smem:[#allocation0]]
  $region129: #{tpu_custom_call.1} parent=0
    _
  %s21 = ssub.s32 1, %s19
  %s22 = scalar_select 0, %s21, %s19
  $region1: #{tpu_custom_call.1} parent=0
    #allocation8 [shape = 'u8[1024]{0}', space=vmem, size = 0x400, scoped, tag = 'input window, operand 1']
    #allocation9 [shape = 's32[2]{0}', space=sflag, size = 0x8, scoped, tag = 'scoped memory for tpu_custom_call.1']
    #allocation10 [shape = 's32[2]{0}', space=sflag, size = 0x8, scoped, tag = 'scoped memory for tpu_custom_call.1']
    #allocation11 [shape = 'u8[8192]{0}', space=vmem, size = 0x2000, scoped, tag = 'input window, operand 6, single buffered']
    #allocation12 [shape = 's32[1]{0}', space=sflag, size = 0x4, scoped, tag = 'scoped memory for tpu_custom_call.1']
    #allocation13 [shape = 'u8[8192]{0}', space=vmem, size = 0x2000, scoped, tag = 'input window, operand 8, single buffered']
    #allocation14 [shape = 'u8[8192]{0}', space=vmem, size = 0x2000, scoped, tag = 'input window, operand 12, single buffered']
    #allocation15 [shape = 's32[1]{0}', space=sflag, size = 0x4, scoped, tag = 'scoped memory for tpu_custom_call.1']
    #allocation16 [shape = 'u8[8192]{0}', space=vmem, size = 0x2000, scoped, tag = 'output window, operand 0']
    %23 = vsyncpa [#allocation9], 0
    %s24 = scalar_lea.sflag [#allocation9], 1
    %25 = vsyncpa %s24, 0
    %26 = vsyncpa [#allocation12], 0
    %27 = vsyncpa [#allocation15], 0
    %28 = vsyncpa [#allocation10], 0
    %s29 = scalar_lea.sflag [#allocation10], 1
    %30 = vsyncpa %s29, 0
    loop: start=0, step=1, limit=4
    $region2: #{tpu_custom_call.1} parent=1 // loop_pre_header
      _
    $region3: #{tpu_custom_call.1} parent=1 // loop_header
      %s32 = sphi 0, %s36
      %p33 = scmp.ge.s32.totalorder %s32, 4
      %s39 = sphi 0, %s51
      %s40 = sphi 0, %s47
      %s41 = sphi 0, %s39
      %s42 = sphi 0, %s40
      %s43 = sphi 0, %s41
      %s44 = sphi 0, %s42
      %s54 = sphi 0, %s56
      %s57 = sphi 0, %s54
      %s58 = sphi 0, %s57
      %s74 = sphi 0, %s58
      %s80 = sphi 0, %s82
      %s83 = sphi 0, %s80
      %s84 = sphi 0, %s83
      %s100 = sphi 0, %s84
      %s104 = sphi 0, %s104
      %s106 = sphi 0, %s104
      %s107 = sphi 0, %s106
      %s121 = sphi 0, %s107
      %s125 = sphi 0, %s125
      %s127 = sphi 0, %s125
      %s128 = sphi 0, %s127
      %s142 = sphi 0, %s128
      %s146 = sphi 0, %s146
      %s148 = sphi 0, %s146
      %s149 = sphi 0, %s148
      %s163 = sphi 0, %s149
      %s167 = sphi 0, %s167
      %s169 = sphi 0, %s167
      %s170 = sphi 0, %s169
      %s184 = sphi 0, %s170
      %s188 = sphi 0, %s188
      %s190 = sphi 0, %s188
      %s191 = sphi 0, %s190
      %s205 = sphi 0, %s191
      %s209 = sphi 0, %s209
      %s211 = sphi 0, %s209
      %s212 = sphi 0, %s211
      %s226 = sphi 0, %s212
      %s230 = sphi 0, %s230
      %s232 = sphi 0, %s230
      %s233 = sphi 0, %s232
      %s247 = sphi 0, %s233
      %s251 = sphi 0, %s251
      %s253 = sphi 0, %s251
      %s254 = sphi 0, %s253
      %s268 = sphi 0, %s254
      %s272 = sphi 0, %s272
      %s274 = sphi 0, %s272
      %s275 = sphi 0, %s274
      %s289 = sphi 0, %s275
      %s293 = sphi 0, %s293
      %s295 = sphi 0, %s293
      %s296 = sphi 0, %s295
      %s310 = sphi 0, %s296
      %s316 = sphi 0, %s318
      %s319 = sphi 0, %s316
      %s320 = sphi 0, %s319
      %s336 = sphi 0, %s320
      %s342 = sphi 0, %s344
      %s345 = sphi 0, %s342
      %s346 = sphi 0, %s345
      %s362 = sphi 0, %s346
      %s368 = sphi 0, %s370
      %s371 = sphi 0, %s368
      %s372 = sphi 0, %s371
      %s388 = sphi 0, %s372
      %s392 = sphi 0, %s392
      %s394 = sphi 0, %s392
      %s395 = sphi 0, %s394
      %s409 = sphi 0, %s395
      %s413 = sphi 0, %s413
      %s415 = sphi 0, %s413
      %s416 = sphi 0, %s415
      %s430 = sphi 0, %s416
      %s434 = sphi 0, %s434
      %s436 = sphi 0, %s434
      %s437 = sphi 0, %s436
      %s451 = sphi 0, %s437
      %s457 = sphi 0, %s459
      %s460 = sphi 0, %s457
      %s461 = sphi 0, %s460
      %s477 = sphi 0, %s461
    $region4: #{tpu_custom_call.1} parent=1 // loop_header_branch
      %35 = sbr.rel (%p33) target = $region8
    $region5: #{tpu_custom_call.1} parent=1 // loop_body
      %s37 = ssub.s32 %s32, 1
      %s38 = ssub.s32 %s32, 2
      %s45 = sadd.s32 1, %s40
      %p46 = scmp.ge.s32.totalorder %s45, 1
      %s47 = scalar_select %p46, 0, %s45
      %s48 = sadd.s32 1, %s39
      %s49 = scalar_select %p46, %s48, %s39
      %p50 = scmp.ge.s32.totalorder %s49, 2
      %s51 = scalar_select %p50, 0, %s49
      %s52 = ssub.s32 %s39, %s51
      %p53 = scmp.eq.s32.totalorder %s52, 0
      %s55 = sadd.s32 %s54, 1
      %s56 = scalar_select %p53, %s54, %s55
      %p59 = pneg %p53
      %p60 = scmp.eq.s32.totalorder %s32, 1
      %p61 = por %p59, %p60
      %p62 = scmp.ne.s32.totalorder %s54, %s57
      %p63 = scmp.eq.s32.totalorder %s32, 0
      %p64 = por %p62, %p63
      %p65 = scmp.ne.s32.totalorder %s54, %s57
      %p66 = scmp.eq.s32.totalorder %s37, 1
      %p67 = por %p65, %p66
      %p68 = scmp.ne.s32.totalorder %s57, %s58
      %p69 = scmp.eq.s32.totalorder %s37, 0
      %p70 = por %p68, %p69
      %p71 = scmp.ne.s32.totalorder %s57, %s58
      %p72 = scmp.eq.s32.totalorder %s38, 1
      %p73 = por %p71, %p72
      %p75 = scmp.ne.s32.totalorder %s58, %s74
      %p76 = scmp.eq.s32.totalorder %s38, 0
      %p77 = por %p75, %p76
      %s78 = ssub.s32 %s39, %s51
      %p79 = scmp.eq.s32.totalorder %s78, 0
      %s81 = sadd.s32 %s80, 1
      %s82 = scalar_select %p79, %s80, %s81
      %p85 = pneg %p79
      %p86 = scmp.eq.s32.totalorder %s32, 1
      %p87 = por %p85, %p86
      %p88 = scmp.ne.s32.totalorder %s80, %s83
      %p89 = scmp.eq.s32.totalorder %s32, 0
      %p90 = por %p88, %p89
      %p91 = scmp.ne.s32.totalorder %s80, %s83
      %p92 = scmp.eq.s32.totalorder %s37, 1
      %p93 = por %p91, %p92
      %p94 = scmp.ne.s32.totalorder %s83, %s84
      %p95 = scmp.eq.s32.totalorder %s37, 0
      %p96 = por %p94, %p95
      %p97 = scmp.ne.s32.totalorder %s83, %s84
      %p98 = scmp.eq.s32.totalorder %s38, 1
      %p99 = por %p97, %p98
      %p101 = scmp.ne.s32.totalorder %s84, %s100
      %p102 = scmp.eq.s32.totalorder %s38, 0
      %p103 = por %p101, %p102
      %s105 = sadd.s32 %s104, 1
      %p108 = scmp.eq.s32.totalorder %s32, 1
      %p109 = scmp.ne.s32.totalorder %s104, %s106
      %p110 = scmp.eq.s32.totalorder %s32, 0
      %p111 = por %p109, %p110
      %p112 = scmp.ne.s32.totalorder %s104, %s106
      %p113 = scmp.eq.s32.totalorder %s37, 1
      %p114 = por %p112, %p113
      %p115 = scmp.ne.s32.totalorder %s106, %s107
      %p116 = scmp.eq.s32.totalorder %s37, 0
      %p117 = por %p115, %p116
      %p118 = scmp.ne.s32.totalorder %s106, %s107
      %p119 = scmp.eq.s32.totalorder %s38, 1
      %p120 = por %p118, %p119
      %p122 = scmp.ne.s32.totalorder %s107, %s121
      %p123 = scmp.eq.s32.totalorder %s38, 0
      %p124 = por %p122, %p123
      %s126 = sadd.s32 %s125, 1
      %p129 = scmp.eq.s32.totalorder %s32, 1
      %p130 = scmp.ne.s32.totalorder %s125, %s127
      %p131 = scmp.eq.s32.totalorder %s32, 0
      %p132 = por %p130, %p131
      %p133 = scmp.ne.s32.totalorder %s125, %s127
      %p134 = scmp.eq.s32.totalorder %s37, 1
      %p135 = por %p133, %p134
      %p136 = scmp.ne.s32.totalorder %s127, %s128
      %p137 = scmp.eq.s32.totalorder %s37, 0
      %p138 = por %p136, %p137
      %p139 = scmp.ne.s32.totalorder %s127, %s128
      %p140 = scmp.eq.s32.totalorder %s38, 1
      %p141 = por %p139, %p140
      %p143 = scmp.ne.s32.totalorder %s128, %s142
      %p144 = scmp.eq.s32.totalorder %s38, 0
      %p145 = por %p143, %p144
      %s147 = sadd.s32 %s146, 1
      %p150 = scmp.eq.s32.totalorder %s32, 1
      %p151 = scmp.ne.s32.totalorder %s146, %s148
      %p152 = scmp.eq.s32.totalorder %s32, 0
      %p153 = por %p151, %p152
      %p154 = scmp.ne.s32.totalorder %s146, %s148
      %p155 = scmp.eq.s32.totalorder %s37, 1
      %p156 = por %p154, %p155
      %p157 = scmp.ne.s32.totalorder %s148, %s149
      %p158 = scmp.eq.s32.totalorder %s37, 0
      %p159 = por %p157, %p158
      %p160 = scmp.ne.s32.totalorder %s148, %s149
      %p161 = scmp.eq.s32.totalorder %s38, 1
      %p162 = por %p160, %p161
      %p164 = scmp.ne.s32.totalorder %s149, %s163
      %p165 = scmp.eq.s32.totalorder %s38, 0
      %p166 = por %p164, %p165
      %s168 = sadd.s32 %s167, 1
      %p171 = scmp.eq.s32.totalorder %s32, 1
      %p172 = scmp.ne.s32.totalorder %s167, %s169
      %p173 = scmp.eq.s32.totalorder %s32, 0
      %p174 = por %p172, %p173
      %p175 = scmp.ne.s32.totalorder %s167, %s169
      %p176 = scmp.eq.s32.totalorder %s37, 1
      %p177 = por %p175, %p176
      %p178 = scmp.ne.s32.totalorder %s169, %s170
      %p179 = scmp.eq.s32.totalorder %s37, 0
      %p180 = por %p178, %p179
      %p181 = scmp.ne.s32.totalorder %s169, %s170
      %p182 = scmp.eq.s32.totalorder %s38, 1
      %p183 = por %p181, %p182
      %p185 = scmp.ne.s32.totalorder %s170, %s184
      %p186 = scmp.eq.s32.totalorder %s38, 0
      %p187 = por %p185, %p186
      %s189 = sadd.s32 %s188, 1
      %p192 = scmp.eq.s32.totalorder %s32, 1
      %p193 = scmp.ne.s32.totalorder %s188, %s190
      %p194 = scmp.eq.s32.totalorder %s32, 0
      %p195 = por %p193, %p194
      %p196 = scmp.ne.s32.totalorder %s188, %s190
      %p197 = scmp.eq.s32.totalorder %s37, 1
      %p198 = por %p196, %p197
      %p199 = scmp.ne.s32.totalorder %s190, %s191
      %p200 = scmp.eq.s32.totalorder %s37, 0
      %p201 = por %p199, %p200
      %p202 = scmp.ne.s32.totalorder %s190, %s191
      %p203 = scmp.eq.s32.totalorder %s38, 1
      %p204 = por %p202, %p203
      %p206 = scmp.ne.s32.totalorder %s191, %s205
      %p207 = scmp.eq.s32.totalorder %s38, 0
      %p208 = por %p206, %p207
      %s210 = sadd.s32 %s209, 1
      %p213 = scmp.eq.s32.totalorder %s32, 1
      %p214 = scmp.ne.s32.totalorder %s209, %s211
      %p215 = scmp.eq.s32.totalorder %s32, 0
      %p216 = por %p214, %p215
      %p217 = scmp.ne.s32.totalorder %s209, %s211
      %p218 = scmp.eq.s32.totalorder %s37, 1
      %p219 = por %p217, %p218
      %p220 = scmp.ne.s32.totalorder %s211, %s212
      %p221 = scmp.eq.s32.totalorder %s37, 0
      %p222 = por %p220, %p221
      %p223 = scmp.ne.s32.totalorder %s211, %s212
      %p224 = scmp.eq.s32.totalorder %s38, 1
      %p225 = por %p223, %p224
      %p227 = scmp.ne.s32.totalorder %s212, %s226
      %p228 = scmp.eq.s32.totalorder %s38, 0
      %p229 = por %p227, %p228
      %s231 = sadd.s32 %s230, 1
      %p234 = scmp.eq.s32.totalorder %s32, 1
      %p235 = scmp.ne.s32.totalorder %s230, %s232
      %p236 = scmp.eq.s32.totalorder %s32, 0
      %p237 = por %p235, %p236
      %p238 = scmp.ne.s32.totalorder %s230, %s232
      %p239 = scmp.eq.s32.totalorder %s37, 1
      %p240 = por %p238, %p239
      %p241 = scmp.ne.s32.totalorder %s232, %s233
      %p242 = scmp.eq.s32.totalorder %s37, 0
      %p243 = por %p241, %p242
      %p244 = scmp.ne.s32.totalorder %s232, %s233
      %p245 = scmp.eq.s32.totalorder %s38, 1
      %p246 = por %p244, %p245
      %p248 = scmp.ne.s32.totalorder %s233, %s247
      %p249 = scmp.eq.s32.totalorder %s38, 0
      %p250 = por %p248, %p249
      %s252 = sadd.s32 %s251, 1
      %p255 = scmp.eq.s32.totalorder %s32, 1
      %p256 = scmp.ne.s32.totalorder %s251, %s253
      %p257 = scmp.eq.s32.totalorder %s32, 0
      %p258 = por %p256, %p257
      %p259 = scmp.ne.s32.totalorder %s251, %s253
      %p260 = scmp.eq.s32.totalorder %s37, 1
      %p261 = por %p259, %p260
      %p262 = scmp.ne.s32.totalorder %s253, %s254
      %p263 = scmp.eq.s32.totalorder %s37, 0
      %p264 = por %p262, %p263
      %p265 = scmp.ne.s32.totalorder %s253, %s254
      %p266 = scmp.eq.s32.totalorder %s38, 1
      %p267 = por %p265, %p266
      %p269 = scmp.ne.s32.totalorder %s254, %s268
      %p270 = scmp.eq.s32.totalorder %s38, 0
      %p271 = por %p269, %p270
      %s273 = sadd.s32 %s272, 1
      %p276 = scmp.eq.s32.totalorder %s32, 1
      %p277 = scmp.ne.s32.totalorder %s272, %s274
      %p278 = scmp.eq.s32.totalorder %s32, 0
      %p279 = por %p277, %p278
      %p280 = scmp.ne.s32.totalorder %s272, %s274
      %p281 = scmp.eq.s32.totalorder %s37, 1
      %p282 = por %p280, %p281
      %p283 = scmp.ne.s32.totalorder %s274, %s275
      %p284 = scmp.eq.s32.totalorder %s37, 0
      %p285 = por %p283, %p284
      %p286 = scmp.ne.s32.totalorder %s274, %s275
      %p287 = scmp.eq.s32.totalorder %s38, 1
      %p288 = por %p286, %p287
      %p290 = scmp.ne.s32.totalorder %s275, %s289
      %p291 = scmp.eq.s32.totalorder %s38, 0
      %p292 = por %p290, %p291
      %s294 = sadd.s32 %s293, 1
      %p297 = scmp.eq.s32.totalorder %s32, 1
      %p298 = scmp.ne.s32.totalorder %s293, %s295
      %p299 = scmp.eq.s32.totalorder %s32, 0
      %p300 = por %p298, %p299
      %p301 = scmp.ne.s32.totalorder %s293, %s295
      %p302 = scmp.eq.s32.totalorder %s37, 1
      %p303 = por %p301, %p302
      %p304 = scmp.ne.s32.totalorder %s295, %s296
      %p305 = scmp.eq.s32.totalorder %s37, 0
      %p306 = por %p304, %p305
      %p307 = scmp.ne.s32.totalorder %s295, %s296
      %p308 = scmp.eq.s32.totalorder %s38, 1
      %p309 = por %p307, %p308
      %p311 = scmp.ne.s32.totalorder %s296, %s310
      %p312 = scmp.eq.s32.totalorder %s38, 0
      %p313 = por %p311, %p312
      %s314 = ssub.s32 %s40, %s47
      %p315 = scmp.eq.s32.totalorder %s314, 0
      %s317 = sadd.s32 %s316, 1
      %s318 = scalar_select %p315, %s316, %s317
      %p321 = pneg %p315
      %p322 = scmp.eq.s32.totalorder %s32, 1
      %p323 = por %p321, %p322
      %p324 = scmp.ne.s32.totalorder %s316, %s319
      %p325 = scmp.eq.s32.totalorder %s32, 0
      %p326 = por %p324, %p325
      %p327 = scmp.ne.s32.totalorder %s316, %s319
      %p328 = scmp.eq.s32.totalorder %s37, 1
      %p329 = por %p327, %p328
      %p330 = scmp.ne.s32.totalorder %s319, %s320
      %p331 = scmp.eq.s32.totalorder %s37, 0
      %p332 = por %p330, %p331
      %p333 = scmp.ne.s32.totalorder %s319, %s320
      %p334 = scmp.eq.s32.totalorder %s38, 1
      %p335 = por %p333, %p334
      %p337 = scmp.ne.s32.totalorder %s320, %s336
      %p338 = scmp.eq.s32.totalorder %s38, 0
      %p339 = por %p337, %p338
      %s340 = ssub.s32 %s40, %s47
      %p341 = scmp.eq.s32.totalorder %s340, 0
      %s343 = sadd.s32 %s342, 1
      %s344 = scalar_select %p341, %s342, %s343
      %p347 = pneg %p341
      %p348 = scmp.eq.s32.totalorder %s32, 1
      %p349 = por %p347, %p348
      %p350 = scmp.ne.s32.totalorder %s342, %s345
      %p351 = scmp.eq.s32.totalorder %s32, 0
      %p352 = por %p350, %p351
      %p353 = scmp.ne.s32.totalorder %s342, %s345
      %p354 = scmp.eq.s32.totalorder %s37, 1
      %p355 = por %p353, %p354
      %p356 = scmp.ne.s32.totalorder %s345, %s346
      %p357 = scmp.eq.s32.totalorder %s37, 0
      %p358 = por %p356, %p357
      %p359 = scmp.ne.s32.totalorder %s345, %s346
      %p360 = scmp.eq.s32.totalorder %s38, 1
      %p361 = por %p359, %p360
      %p363 = scmp.ne.s32.totalorder %s346, %s362
      %p364 = scmp.eq.s32.totalorder %s38, 0
      %p365 = por %p363, %p364
      %s366 = ssub.s32 %s40, %s47
      %p367 = scmp.eq.s32.totalorder %s366, 0
      %s369 = sadd.s32 %s368, 1
      %s370 = scalar_select %p367, %s368, %s369
      %p373 = pneg %p367
      %p374 = scmp.eq.s32.totalorder %s32, 1
      %p375 = por %p373, %p374
      %p376 = scmp.ne.s32.totalorder %s368, %s371
      %p377 = scmp.eq.s32.totalorder %s32, 0
      %p378 = por %p376, %p377
      %p379 = scmp.ne.s32.totalorder %s368, %s371
      %p380 = scmp.eq.s32.totalorder %s37, 1
      %p381 = por %p379, %p380
      %p382 = scmp.ne.s32.totalorder %s371, %s372
      %p383 = scmp.eq.s32.totalorder %s37, 0
      %p384 = por %p382, %p383
      %p385 = scmp.ne.s32.totalorder %s371, %s372
      %p386 = scmp.eq.s32.totalorder %s38, 1
      %p387 = por %p385, %p386
      %p389 = scmp.ne.s32.totalorder %s372, %s388
      %p390 = scmp.eq.s32.totalorder %s38, 0
      %p391 = por %p389, %p390
      %s393 = sadd.s32 %s392, 1
      %p396 = scmp.eq.s32.totalorder %s32, 1
      %p397 = scmp.ne.s32.totalorder %s392, %s394
      %p398 = scmp.eq.s32.totalorder %s32, 0
      %p399 = por %p397, %p398
      %p400 = scmp.ne.s32.totalorder %s392, %s394
      %p401 = scmp.eq.s32.totalorder %s37, 1
      %p402 = por %p400, %p401
      %p403 = scmp.ne.s32.totalorder %s394, %s395
      %p404 = scmp.eq.s32.totalorder %s37, 0
      %p405 = por %p403, %p404
      %p406 = scmp.ne.s32.totalorder %s394, %s395
      %p407 = scmp.eq.s32.totalorder %s38, 1
      %p408 = por %p406, %p407
      %p410 = scmp.ne.s32.totalorder %s395, %s409
      %p411 = scmp.eq.s32.totalorder %s38, 0
      %p412 = por %p410, %p411
      %s414 = sadd.s32 %s413, 1
      %p417 = scmp.eq.s32.totalorder %s32, 1
      %p418 = scmp.ne.s32.totalorder %s413, %s415
      %p419 = scmp.eq.s32.totalorder %s32, 0
      %p420 = por %p418, %p419
      %p421 = scmp.ne.s32.totalorder %s413, %s415
      %p422 = scmp.eq.s32.totalorder %s37, 1
      %p423 = por %p421, %p422
      %p424 = scmp.ne.s32.totalorder %s415, %s416
      %p425 = scmp.eq.s32.totalorder %s37, 0
      %p426 = por %p424, %p425
      %p427 = scmp.ne.s32.totalorder %s415, %s416
      %p428 = scmp.eq.s32.totalorder %s38, 1
      %p429 = por %p427, %p428
      %p431 = scmp.ne.s32.totalorder %s416, %s430
      %p432 = scmp.eq.s32.totalorder %s38, 0
      %p433 = por %p431, %p432
      %s435 = sadd.s32 %s434, 1
      %p438 = scmp.eq.s32.totalorder %s32, 1
      %p439 = scmp.ne.s32.totalorder %s434, %s436
      %p440 = scmp.eq.s32.totalorder %s32, 0
      %p441 = por %p439, %p440
      %p442 = scmp.ne.s32.totalorder %s434, %s436
      %p443 = scmp.eq.s32.totalorder %s37, 1
      %p444 = por %p442, %p443
      %p445 = scmp.ne.s32.totalorder %s436, %s437
      %p446 = scmp.eq.s32.totalorder %s37, 0
      %p447 = por %p445, %p446
      %p448 = scmp.ne.s32.totalorder %s436, %s437
      %p449 = scmp.eq.s32.totalorder %s38, 1
      %p450 = por %p448, %p449
      %p452 = scmp.ne.s32.totalorder %s437, %s451
      %p453 = scmp.eq.s32.totalorder %s38, 0
      %p454 = por %p452, %p453
      %s455 = ssub.s32 %s39, %s51
      %p456 = scmp.eq.s32.totalorder %s455, 0
      %s458 = sadd.s32 %s457, 1
      %s459 = scalar_select %p456, %s457, %s458
      %p462 = pneg %p456
      %p463 = scmp.eq.s32.totalorder %s32, 1
      %p464 = por %p462, %p463
      %p465 = scmp.ne.s32.totalorder %s457, %s460
      %p466 = scmp.eq.s32.totalorder %s32, 0
      %p467 = por %p465, %p466
      %p468 = scmp.ne.s32.totalorder %s457, %s460
      %p469 = scmp.eq.s32.totalorder %s37, 1
      %p470 = por %p468, %p469
      %p471 = scmp.ne.s32.totalorder %s460, %s461
      %p472 = scmp.eq.s32.totalorder %s37, 0
      %p473 = por %p471, %p472
      %p474 = scmp.ne.s32.totalorder %s460, %s461
      %p475 = scmp.eq.s32.totalorder %s38, 1
      %p476 = por %p474, %p475
      %p478 = scmp.ne.s32.totalorder %s461, %s477
      %p479 = scmp.eq.s32.totalorder %s38, 0
      %p480 = por %p478, %p479
      %p481 = scmp.le.s32.totalorder 1, %s32
      %p482 = scmp.lt.s32.totalorder %s32, 3
      %p483 = pnand %p481, %p482
      %p484 = pneg %p483
      // Predicated region
      $region9: #{tpu_custom_call.1} parent=5 // pred_check
        _
      $region10: #{tpu_custom_call.1} parent=5 // pred_check_branch
        %486 = sbr.rel (%p483) target = $region12
      $region11: #{tpu_custom_call.1} parent=5 // pred_region
        %s487 = ssub.s32 %s32, 1
        // Predicated region
        $region13: #{tpu_custom_call.1} parent=11 // pred_check
          %p488 = pneg %p117
        $region14: #{tpu_custom_call.1} parent=11 // pred_check_branch
          %490 = sbr.rel (%p488) target = $region16
        $region15: #{tpu_custom_call.1} parent=11 // pred_region
          _
        $region16: #{tpu_custom_call.1} parent=11 // pred_fallthru
          _
        // Predicated region
        $region17: #{tpu_custom_call.1} parent=11 // pred_check
          %p491 = pneg %p138
        $region18: #{tpu_custom_call.1} parent=11 // pred_check_branch
          %493 = sbr.rel (%p491) target = $region20
        $region19: #{tpu_custom_call.1} parent=11 // pred_region
          _
        $region20: #{tpu_custom_call.1} parent=11 // pred_fallthru
          _
        // Predicated region
        $region21: #{tpu_custom_call.1} parent=11 // pred_check
          %p494 = pneg %p159
        $region22: #{tpu_custom_call.1} parent=11 // pred_check_branch
          %496 = sbr.rel (%p494) target = $region24
        $region23: #{tpu_custom_call.1} parent=11 // pred_region
          _
        $region24: #{tpu_custom_call.1} parent=11 // pred_fallthru
          _
        // Predicated region
        $region25: #{tpu_custom_call.1} parent=11 // pred_check
          %p497 = pneg %p180
        $region26: #{tpu_custom_call.1} parent=11 // pred_check_branch
          %499 = sbr.rel (%p497) target = $region28
        $region27: #{tpu_custom_call.1} parent=11 // pred_region
          _
        $region28: #{tpu_custom_call.1} parent=11 // pred_fallthru
          _
        // Predicated region
        $region29: #{tpu_custom_call.1} parent=11 // pred_check
          %p500 = pneg %p201
        $region30: #{tpu_custom_call.1} parent=11 // pred_check_branch
          %502 = sbr.rel (%p500) target = $region32
        $region31: #{tpu_custom_call.1} parent=11 // pred_region
          %504 = vsyncadd [#allocation12], 0
          %s505 = sshll.u32 %s6, 4
          %s506 = int_to_ptr.hbm [resolvable:$true] %s505
          %s507 = sshll.u32 [#allocation11], 4
          %s508 = int_to_ptr.vmem [resolvable:$true] %s507
          %513 = dma.hbm_to_vmem [thread:$0]  %s506, 256, %s508, [#allocation12], 64, 64, 4
        $region32: #{tpu_custom_call.1} parent=11 // pred_fallthru
          _
        // Predicated region
        $region33: #{tpu_custom_call.1} parent=11 // pred_check
          %p514 = pneg %p222
        $region34: #{tpu_custom_call.1} parent=11 // pred_check_branch
          %516 = sbr.rel (%p514) target = $region36
        $region35: #{tpu_custom_call.1} parent=11 // pred_region
          _
        $region36: #{tpu_custom_call.1} parent=11 // pred_fallthru
          _
        // Predicated region
        $region37: #{tpu_custom_call.1} parent=11 // pred_check
          %p517 = pneg %p243
        $region38: #{tpu_custom_call.1} parent=11 // pred_check_branch
          %519 = sbr.rel (%p517) target = $region40
        $region39: #{tpu_custom_call.1} parent=11 // pred_region
          %521 = vsyncadd [#allocation12], 0
          %s522 = sshll.u32 %s8, 4
          %s523 = int_to_ptr.hbm [resolvable:$true] %s522
          %s524 = sshll.u32 [#allocation13], 4
          %s525 = int_to_ptr.vmem [resolvable:$true] %s524
          %530 = dma.hbm_to_vmem [thread:$0]  %s523, 256, %s525, [#allocation12], 64, 64, 4
        $region40: #{tpu_custom_call.1} parent=11 // pred_fallthru
          _
        // Predicated region
        $region41: #{tpu_custom_call.1} parent=11 // pred_check
          %p531 = pneg %p264
        $region42: #{tpu_custom_call.1} parent=11 // pred_check_branch
          %533 = sbr.rel (%p531) target = $region44
        $region43: #{tpu_custom_call.1} parent=11 // pred_region
          _
        $region44: #{tpu_custom_call.1} parent=11 // pred_fallthru
          _
        // Predicated region
        $region45: #{tpu_custom_call.1} parent=11 // pred_check
          %p534 = pneg %p285
        $region46: #{tpu_custom_call.1} parent=11 // pred_check_branch
          %536 = sbr.rel (%p534) target = $region48
        $region47: #{tpu_custom_call.1} parent=11 // pred_region
          _
        $region48: #{tpu_custom_call.1} parent=11 // pred_fallthru
          _
        // Predicated region
        $region49: #{tpu_custom_call.1} parent=11 // pred_check
          %p537 = pneg %p306
        $region50: #{tpu_custom_call.1} parent=11 // pred_check_branch
          %539 = sbr.rel (%p537) target = $region52
        $region51: #{tpu_custom_call.1} parent=11 // pred_region
          _
        $region52: #{tpu_custom_call.1} parent=11 // pred_fallthru
          _
        // Predicated region
        $region53: #{tpu_custom_call.1} parent=11 // pred_check
          %p540 = pneg %p332
        $region54: #{tpu_custom_call.1} parent=11 // pred_check_branch
          %542 = sbr.rel (%p540) target = $region56
        $region55: #{tpu_custom_call.1} parent=11 // pred_region
          %544 = vsyncadd [#allocation15], 0
          %s545 = smul.addr %s42, 4
          %s546 = scalar_lea.hbm %s12, %s545
          %s547 = sshll.u32 %s546, 4
          %s548 = int_to_ptr.hbm [resolvable:$true] %s547
          %s549 = sshll.u32 [#allocation14], 4
          %s550 = int_to_ptr.vmem [resolvable:$true] %s549
          %555 = dma.hbm_to_vmem [thread:$0]  %s548, 256, %s550, [#allocation15], 64, 64, 4
        $region56: #{tpu_custom_call.1} parent=11 // pred_fallthru
          _
        // Predicated region
        $region57: #{tpu_custom_call.1} parent=11 // pred_check
          %p556 = pneg %p358
        $region58: #{tpu_custom_call.1} parent=11 // pred_check_branch
          %558 = sbr.rel (%p556) target = $region60
        $region59: #{tpu_custom_call.1} parent=11 // pred_region
          %p559 = scmp.lt.s32.totalorder %s42, 0
          %s560 = scalar_select %p559, %s42, 0
          %s561 = scalar_lea.vmem %s13, %s560
        $region60: #{tpu_custom_call.1} parent=11 // pred_fallthru
          _
        // Predicated region
        $region61: #{tpu_custom_call.1} parent=11 // pred_check
          %p562 = pneg %p384
        $region62: #{tpu_custom_call.1} parent=11 // pred_check_branch
          %564 = sbr.rel (%p562) target = $region64
        $region63: #{tpu_custom_call.1} parent=11 // pred_region
          %s565 = smul.u32 8, %s42
          %p566 = scmp.lt.s32.totalorder %s565, 7
          %s567 = scalar_select %p566, %s565, 7
          %s568 = smul.addr %s567, 4
          %s569 = scalar_lea.vmem %s14, %s568
          %s570 = smul.u32 8, %s42
        $region64: #{tpu_custom_call.1} parent=11 // pred_fallthru
          _
        // Predicated region
        $region65: #{tpu_custom_call.1} parent=11 // pred_check
          %p571 = pneg %p405
        $region66: #{tpu_custom_call.1} parent=11 // pred_check_branch
          %573 = sbr.rel (%p571) target = $region68
        $region67: #{tpu_custom_call.1} parent=11 // pred_region
          _
        $region68: #{tpu_custom_call.1} parent=11 // pred_fallthru
          _
        // Predicated region
        $region69: #{tpu_custom_call.1} parent=11 // pred_check
          %p574 = pneg %p426
        $region70: #{tpu_custom_call.1} parent=11 // pred_check_branch
          %576 = sbr.rel (%p574) target = $region72
        $region71: #{tpu_custom_call.1} parent=11 // pred_region
          _
        $region72: #{tpu_custom_call.1} parent=11 // pred_fallthru
          _
        // Predicated region
        $region73: #{tpu_custom_call.1} parent=11 // pred_check
          %p577 = pneg %p447
        $region74: #{tpu_custom_call.1} parent=11 // pred_check_branch
          %579 = sbr.rel (%p577) target = $region76
        $region75: #{tpu_custom_call.1} parent=11 // pred_region
          _
        $region76: #{tpu_custom_call.1} parent=11 // pred_fallthru
          _
      $region12: #{tpu_custom_call.1} parent=5 // pred_fallthru
        _
      %p580 = scmp.lt.s32.totalorder %s32, 2
      // Predicated region
      $region77: #{tpu_custom_call.1} parent=5 // pred_check
        %p581 = pneg %p580
      $region78: #{tpu_custom_call.1} parent=5 // pred_check_branch
        %583 = sbr.rel (%p581) target = $region80
      $region79: #{tpu_custom_call.1} parent=5 // pred_region
        // Predicated region
        $region81: #{tpu_custom_call.1} parent=79 // pred_check
          %p584 = pneg %p64
        $region82: #{tpu_custom_call.1} parent=79 // pred_check_branch
          %586 = sbr.rel (%p584) target = $region84
        $region83: #{tpu_custom_call.1} parent=79 // pred_region
          %p587 = scmp.lt.s32.totalorder %s39, 1
          %s588 = scalar_select %p587, %s39, 1
          %s589 = smul.addr %s588, 8
          %s590 = scalar_lea.vmem %s0, %s589
        $region84: #{tpu_custom_call.1} parent=79 // pred_fallthru
          _
        // Predicated region
        $region85: #{tpu_custom_call.1} parent=79 // pred_check
          %p591 = pneg %p90
        $region86: #{tpu_custom_call.1} parent=79 // pred_check_branch
          %593 = sbr.rel (%p591) target = $region88
        $region87: #{tpu_custom_call.1} parent=79 // pred_region
          %s594 = sand.u32 %s80, 1
          %s595 = scalar_lea.sflag [#allocation9], %s594
          %s596 = sand.u32 %s80, 1
          %s597 = scalar_lea.vmem [#allocation8], %s596
          %599 = vsyncadd %s595, 0
          %s600 = scalar_lea.hbm %s1, %s39
          %s602 = sshll.u32 %s600, 4
          %s603 = int_to_ptr.hbm [resolvable:$true] %s602
          %s604 = sshll.u32 %s597, 4
          %s605 = int_to_ptr.vmem [resolvable:$true] %s604
          %607 = dma.hbm_to_vmem [thread:$0]  %s603, 16, %s605, %s595
        $region88: #{tpu_custom_call.1} parent=79 // pred_fallthru
          _
      $region80: #{tpu_custom_call.1} parent=5 // pred_fallthru
        _
      %p608 = scmp.le.s32.totalorder 1, %s32
      %p609 = scmp.lt.s32.totalorder %s32, 3
      %p610 = pnand %p608, %p609
      %p611 = pneg %p610
      // Predicated region
      $region89: #{tpu_custom_call.1} parent=5 // pred_check
        _
      $region90: #{tpu_custom_call.1} parent=5 // pred_check_branch
        %613 = sbr.rel (%p610) target = $region92
      $region91: #{tpu_custom_call.1} parent=5 // pred_region
        %s614 = ssub.s32 %s32, 1
        %s615 = sand.u32 %s83, 1
        %s616 = scalar_lea.sflag [#allocation9], %s615
        %s617 = sand.u32 %s83, 1
        %s618 = scalar_lea.vmem [#allocation8], %s617
        // Predicated region
        $region93: #{tpu_custom_call.1} parent=91 // pred_check
          %p619 = pneg %p96
        $region94: #{tpu_custom_call.1} parent=91 // pred_check_branch
          %621 = sbr.rel (%p619) target = $region96
        $region95: #{tpu_custom_call.1} parent=91 // pred_region
          %623 = dma.done %s616, 16
        $region96: #{tpu_custom_call.1} parent=91 // pred_fallthru
          _
        // Predicated region
        $region97: #{tpu_custom_call.1} parent=91 // pred_check
          %p624 = pneg %p201
        $region98: #{tpu_custom_call.1} parent=91 // pred_check_branch
          %626 = sbr.rel (%p624) target = $region100
        $region99: #{tpu_custom_call.1} parent=91 // pred_region
          %628 = dma.done [#allocation12], 256
        $region100: #{tpu_custom_call.1} parent=91 // pred_fallthru
          _
        // Predicated region
        $region101: #{tpu_custom_call.1} parent=91 // pred_check
          %p629 = pneg %p243
        $region102: #{tpu_custom_call.1} parent=91 // pred_check_branch
          %631 = sbr.rel (%p629) target = $region104
        $region103: #{tpu_custom_call.1} parent=91 // pred_region
          %633 = dma.done [#allocation12], 256
        $region104: #{tpu_custom_call.1} parent=91 // pred_fallthru
          _
        // Predicated region
        $region105: #{tpu_custom_call.1} parent=91 // pred_check
          %p634 = pneg %p332
        $region106: #{tpu_custom_call.1} parent=91 // pred_check_branch
          %636 = sbr.rel (%p634) target = $region108
        $region107: #{tpu_custom_call.1} parent=91 // pred_region
          %638 = dma.done [#allocation15], 256
        $region108: #{tpu_custom_call.1} parent=91 // pred_fallthru
          _
        %p639 = scmp.lt.s32.totalorder %s41, 1
        %s640 = scalar_select %p639, %s41, 1
        %s641 = smul.addr %s640, 8
        %s642 = scalar_lea.vmem %s0, %s641
        %p643 = pneg %p70
        %p644 = pneg %p67
        %s645 = sand.u32 %s83, 1
        %s646 = scalar_lea.sflag [#allocation9], %s645
        %s647 = sand.u32 %s83, 1
        %s648 = scalar_lea.vmem [#allocation8], %s647
        %p649 = pneg %p96
        %p650 = pneg %p93
        %p651 = pneg %p117
        %p652 = pneg %p114
        %p653 = pneg %p138
        %p654 = pneg %p135
        %p655 = pneg %p159
        %p656 = pneg %p156
        %p657 = pneg %p180
        %p658 = pneg %p177
        %p659 = pneg %p201
        %p660 = pneg %p198
        %p661 = pneg %p222
        %p662 = pneg %p219
        %p663 = pneg %p243
        %p664 = pneg %p240
        %p665 = pneg %p264
        %p666 = pneg %p261
        %p667 = pneg %p285
        %p668 = pneg %p282
        %p669 = pneg %p306
        %p670 = pneg %p303
        %p671 = pneg %p332
        %p672 = pneg %p329
        %p673 = scmp.lt.s32.totalorder %s42, 0
        %s674 = scalar_select %p673, %s42, 0
        %s675 = scalar_lea.vmem %s13, %s674
        %p676 = pneg %p358
        %p677 = pneg %p355
        %s678 = smul.u32 8, %s42
        %p679 = scmp.lt.s32.totalorder %s678, 7
        %s680 = scalar_select %p679, %s678, 7
        %s681 = smul.addr %s680, 4
        %s682 = scalar_lea.vmem %s14, %s681
        %p683 = pneg %p384
        %p684 = pneg %p381
        %p685 = pneg %p405
        %p686 = pneg %p402
        %p687 = pneg %p426
        %p688 = pneg %p423
        %p689 = pneg %p447
        %p690 = pneg %p444
        %p691 = pneg %p473
        %p692 = pneg %p470
        %s693 = sand.u32 %s460, 1
        %s694 = scalar_lea.sflag [#allocation10], %s693
        %s695 = sand.u32 %s460, 1
        %s696 = smul.addr %s695, 8
        %s697 = scalar_lea.vmem [#allocation16], %s696
        %p698 = scmp.lt.s32.totalorder %s41, 1
        %s699 = scalar_select %p698, %s41, 1
        %s700 = smul.addr %s699, 8
        %s701 = scalar_lea.vmem %s0, %s700
        %p702 = scmp.lt.s32.totalorder %s42, 0
        %s703 = scalar_select %p702, %s42, 0
        %s704 = scalar_lea.vmem %s13, %s703
        %s705 = smul.u32 8, %s42
        %p706 = scmp.lt.s32.totalorder %s705, 7
        %s707 = scalar_select %p706, %s705, 7
        %s708 = smul.addr %s707, 4
        %s709 = scalar_lea.vmem %s14, %s708
        %s710 = smul.u32 8, %s42
        %p712 = scmp.eq.s32.totalorder %s42, 0
        // Predicated region
        $region109: #{tpu_custom_call.1} parent=91 // pred_check
          %p713 = pneg %p712
        $region110: #{tpu_custom_call.1} parent=91 // pred_check_branch
          %715 = sbr.rel (%p713) target = $region112
        $region111: #{tpu_custom_call.1} parent=91 // pred_region
          %v716 = vld [vmem:[%s701] sm:$0xff]
          %v717 = vpack.c.bf16 %v716, %v716
          %v718 = vld [vmem:[%s2] sm:$0xf]
          %v719 = vld [vmem:[%s2 + $0x4] sm:$0xf]
          %v720 = vld [vmem:[%s2 + $0x8] sm:$0xf]
          %v721 = vld [vmem:[%s2 + $0xc] sm:$0xf]
          %v722 = vld [vmem:[%s3] sm:$0x1]
          %v724 = vperm.slane %v722, 0
          %v730 = vunpack.c.l.b16 %v718
          %v731 = vunpack.c.l.b16 %v719
          %v732 = vunpack.c.l.b16 %v720
          %v733 = vunpack.c.l.b16 %v721
          %v734 = vpack.c.b16 %v731, %v730
          %v735 = vpack.c.b16 %v733, %v732
          %vm738 = vcmask 261120
          %v740 = vsel %vm738, %v717, 0
          %742 = vmatpush.bf16.msra.mxu0 0
          %743 = vmatpush.bf16.msra.mxu0 0
          %744 = vmatpush.bf16.msra.mxu0 0
          %745 = vmatpush.bf16.msra.mxu0 0
          %746 = vmatpush.bf16.msra.mxu0 0
          %747 = vmatpush.bf16.msra.mxu0 0
          %748 = vmatpush.bf16.msra.mxu0 %v735
          %749 = vmatpush.bf16.msra.mxu0 %v734
          %750 = vmatmul.bf16.gmra.mxu0 %v740
          %v751 = vpop.f32.mrf.mxu0
          %v752 = vadd.f32 %v724, %v751
          %v753 = vpop.f32.mrf.mxu0
          %754 = vdwg.mxu0
          %v755 = vld [vmem:[%s4] sm:$0xf]
          %v756 = vld [vmem:[%s4 + $0x4] sm:$0xf]
          %v757 = vld [vmem:[%s4 + $0x8] sm:$0xf]
          %v758 = vld [vmem:[%s4 + $0xc] sm:$0xf]
          %v759 = vld [vmem:[%s5] sm:$0x1]
          %v761 = vperm.slane %v759, 0
          %v767 = vunpack.c.l.b16 %v755
          %v768 = vunpack.c.l.b16 %v756
          %v769 = vunpack.c.l.b16 %v757
          %v770 = vunpack.c.l.b16 %v758
          %v771 = vpack.c.b16 %v768, %v767
          %v772 = vpack.c.b16 %v770, %v769
          %775 = vmatpush.bf16.msra.mxu0 0
          %776 = vmatpush.bf16.msra.mxu0 0
          %777 = vmatpush.bf16.msra.mxu0 0
          %778 = vmatpush.bf16.msra.mxu0 0
          %779 = vmatpush.bf16.msra.mxu0 0
          %780 = vmatpush.bf16.msra.mxu0 0
          %781 = vmatpush.bf16.msra.mxu0 %v772
          %782 = vmatpush.bf16.msra.mxu0 %v771
          %783 = vmatmul.bf16.gmra.mxu0 %v740
          %v784 = vpop.f32.mrf.mxu0
          %v785 = vadd.f32 %v761, %v784
          %v786 = vpop.f32.mrf.mxu0
          %787 = vdwg.mxu0
          %v788 = vld [vmem:[#allocation11] sm:$0xf]
          %v789 = vld [vmem:[#allocation11 + $0x4] sm:$0xf]
          %v790 = vld [vmem:[#allocation11 + $0x8] sm:$0xf]
          %v791 = vld [vmem:[#allocation11 + $0xc] sm:$0xf]
          %v792 = vld [vmem:[%s7] sm:$0x1]
          %v794 = vperm.slane %v792, 0
          %v800 = vunpack.c.l.b16 %v788
          %v801 = vunpack.c.l.b16 %v789
          %v802 = vunpack.c.l.b16 %v790
          %v803 = vunpack.c.l.b16 %v791
          %v804 = vpack.c.b16 %v801, %v800
          %v805 = vpack.c.b16 %v803, %v802
          %808 = vmatpush.bf16.msra.mxu0 0
          %809 = vmatpush.bf16.msra.mxu0 0
          %810 = vmatpush.bf16.msra.mxu0 0
          %811 = vmatpush.bf16.msra.mxu0 0
          %812 = vmatpush.bf16.msra.mxu0 0
          %813 = vmatpush.bf16.msra.mxu0 0
          %814 = vmatpush.bf16.msra.mxu0 %v805
          %815 = vmatpush.bf16.msra.mxu0 %v804
          %816 = vmatmul.bf16.gmra.mxu0 %v740
          %v817 = vpop.f32.mrf.mxu0
          %v818 = vadd.f32 %v794, %v817
          %v819 = vpop.f32.mrf.mxu0
          %820 = vdwg.mxu0
          %v821 = vpack.c.bf16 %v752, %v752
          %vm822 = vcmask 60416
          %823 = vst.msk [vmem:[#allocation2] sm:$0xf] %vm822, %v821
          %v824 = vpack.c.bf16 %v785, %v785
          %825 = vst.msk [vmem:[#allocation3] sm:$0xf] %vm822, %v824
          %v826 = vpack.c.bf16 %v818, %v818
          %827 = vst.msk [vmem:[#allocation4] sm:$0xf] %vm822, %v826
          %829 = vrot.lane.b32.xlu0 %v821, 120
          %v830 = vpop.permute.xlu0 %829
          %s832 = scalar_lea.vmem [#allocation2], 4
          %833 = vst.msk [vmem:[%s832] sm:$0xf] %vm822, %v830
          %835 = vrot.lane.b32.xlu0 %v824, 120
          %v836 = vpop.permute.xlu0 %835
          %s838 = scalar_lea.vmem [#allocation3], 4
          %839 = vst.msk [vmem:[%s838] sm:$0xf] %vm822, %v836
          %841 = vrot.lane.b32.xlu0 %v826, 120
          %v842 = vpop.permute.xlu0 %841
          %s844 = scalar_lea.vmem [#allocation4], 4
          %845 = vst.msk [vmem:[%s844] sm:$0xf] %vm822, %v842
          %846 = vrot.lane.b32.xlu0 %v821, 112
          %v847 = vpop.permute.xlu0 %846
          %s849 = scalar_lea.vmem [#allocation2], 8
          %850 = vst.msk [vmem:[%s849] sm:$0xf] %vm822, %v847
          %851 = vrot.lane.b32.xlu0 %v824, 112
          %v852 = vpop.permute.xlu0 %851
          %s854 = scalar_lea.vmem [#allocation3], 8
          %855 = vst.msk [vmem:[%s854] sm:$0xf] %vm822, %v852
          %856 = vrot.lane.b32.xlu0 %v826, 112
          %v857 = vpop.permute.xlu0 %856
          %s859 = scalar_lea.vmem [#allocation4], 8
          %860 = vst.msk [vmem:[%s859] sm:$0xf] %vm822, %v857
          %861 = vrot.lane.b32.xlu0 %v821, 104
          %v862 = vpop.permute.xlu0 %861
          %s864 = scalar_lea.vmem [#allocation2], 12
          %865 = vst.msk [vmem:[%s864] sm:$0xf] %vm822, %v862
          %866 = vrot.lane.b32.xlu0 %v824, 104
          %v867 = vpop.permute.xlu0 %866
          %s869 = scalar_lea.vmem [#allocation3], 12
          %870 = vst.msk [vmem:[%s869] sm:$0xf] %vm822, %v867
          %871 = vrot.lane.b32.xlu0 %v826, 104
          %v872 = vpop.permute.xlu0 %871
          %s874 = scalar_lea.vmem [#allocation4], 12
          %875 = vst.msk [vmem:[%s874] sm:$0xf] %vm822, %v872
          %v876 = vld [vmem:[#allocation2] sm:$0xf]
          %v877 = vld [vmem:[#allocation2 + $0x4] sm:$0xf]
          %v878 = vld [vmem:[#allocation2 + $0x8] sm:$0xf]
          %v879 = vld [vmem:[#allocation2 + $0xc] sm:$0xf]
          %v880 = vld [vmem:[#allocation3] sm:$0xf]
          %v881 = vld [vmem:[#allocation3 + $0x4] sm:$0xf]
          %v882 = vld [vmem:[#allocation3 + $0x8] sm:$0xf]
          %v883 = vld [vmem:[#allocation3 + $0xc] sm:$0xf]
          %v884 = vld [vmem:[#allocation4] sm:$0xf]
          %v885 = vld [vmem:[#allocation4 + $0x4] sm:$0xf]
          %v886 = vld [vmem:[#allocation4 + $0x8] sm:$0xf]
          %v887 = vld [vmem:[#allocation4 + $0xc] sm:$0xf]
          %v888 = vld [vmem:[%s618] sm:$0x1]
          %v890 = vperm.slane %v888, 0
          %vm892 = vcmask 64512
          %v894 = vsel %vm892, %v876, 0
          %v897 = vsel %vm892, %v880, 0
          %899 = vmatpush.bf16.xpose.msra.mxu0 0
          %900 = vmatpush.bf16.xpose.msra.mxu0 0
          %901 = vmatpush.bf16.xpose.msra.mxu0 0
          %902 = vmatpush.bf16.xpose.msra.mxu0 0
          %903 = vmatpush.bf16.xpose.msra.mxu0 0
          %904 = vmatpush.bf16.xpose.msra.mxu0 0
          %905 = vmatpush.bf16.xpose.msra.mxu0 0
          %906 = vmatpush.bf16.xpose.msra.mxu0 %v897
          %907 = vmatmul.bf16.gmra.mxu0 %v894
          %v908 = vpop.f32.mrf.mxu0
          %v909 = vadd.f32 %v890, %v908
          %v910 = vpop.f32.mrf.mxu0
          %911 = vdwg.mxu0
          %v913 = vsel %vm892, %v877, 0
          %v916 = vsel %vm892, %v881, 0
          %918 = vmatpush.bf16.xpose.msra.mxu0 0
          %919 = vmatpush.bf16.xpose.msra.mxu0 0
          %920 = vmatpush.bf16.xpose.msra.mxu0 0
          %921 = vmatpush.bf16.xpose.msra.mxu0 0
          %922 = vmatpush.bf16.xpose.msra.mxu0 0
          %923 = vmatpush.bf16.xpose.msra.mxu0 0
          %924 = vmatpush.bf16.xpose.msra.mxu0 0
          %925 = vmatpush.bf16.xpose.msra.mxu0 %v916
          %926 = vmatmul.bf16.gmra.mxu0 %v913
          %v927 = vpop.f32.mrf.mxu0
          %v928 = vadd.f32 %v890, %v927
          %v929 = vpop.f32.mrf.mxu0
          %930 = vdwg.mxu0
          %v932 = vsel %vm892, %v878, 0
          %v935 = vsel %vm892, %v882, 0
          %937 = vmatpush.bf16.xpose.msra.mxu0 0
          %938 = vmatpush.bf16.xpose.msra.mxu0 0
          %939 = vmatpush.bf16.xpose.msra.mxu0 0
          %940 = vmatpush.bf16.xpose.msra.mxu0 0
          %941 = vmatpush.bf16.xpose.msra.mxu0 0
          %942 = vmatpush.bf16.xpose.msra.mxu0 0
          %943 = vmatpush.bf16.xpose.msra.mxu0 0
          %944 = vmatpush.bf16.xpose.msra.mxu0 %v935
          %945 = vmatmul.bf16.gmra.mxu0 %v932
          %v946 = vpop.f32.mrf.mxu0
          %v947 = vadd.f32 %v890, %v946
          %v948 = vpop.f32.mrf.mxu0
          %949 = vdwg.mxu0
          %v951 = vsel %vm892, %v879, 0
          %v954 = vsel %vm892, %v883, 0
          %956 = vmatpush.bf16.xpose.msra.mxu0 0
          %957 = vmatpush.bf16.xpose.msra.mxu0 0
          %958 = vmatpush.bf16.xpose.msra.mxu0 0
          %959 = vmatpush.bf16.xpose.msra.mxu0 0
          %960 = vmatpush.bf16.xpose.msra.mxu0 0
          %961 = vmatpush.bf16.xpose.msra.mxu0 0
          %962 = vmatpush.bf16.xpose.msra.mxu0 0
          %963 = vmatpush.bf16.xpose.msra.mxu0 %v954
          %964 = vmatmul.bf16.gmra.mxu0 %v951
          %v965 = vpop.f32.mrf.mxu0
          %v966 = vadd.f32 %v890, %v965
          %v967 = vpop.f32.mrf.mxu0
          %968 = vdwg.mxu0
          %v969 = vsel %vm892, %v909, -inf
          %970 = vmax.xlane.f32.xlu0 %v969
          %v971 = vpop.xlane.xlu0 %970
          %v972 = vsel %vm892, %v928, -inf
          %973 = vmax.xlane.f32.xlu0 %v972
          %v974 = vpop.xlane.xlu0 %973
          %v975 = vsel %vm892, %v947, -inf
          %976 = vmax.xlane.f32.xlu0 %v975
          %v977 = vpop.xlane.xlu0 %976
          %v978 = vsel %vm892, %v966, -inf
          %979 = vmax.xlane.f32.xlu0 %v978
          %v980 = vpop.xlane.xlu0 %979
          %v981 = vsub.f32 %v909, %v971
          %v982 = vsub.f32 %v928, %v974
          %v983 = vsub.f32 %v947, %v977
          %v984 = vsub.f32 %v966, %v980
          %v985 = vmul.f32 %v981, 1.442695
          %v986 = vpow.pop %v985
          %v987 = vmul.f32 %v982, 1.442695
          %v988 = vpow.pop %v987
          %v989 = vmul.f32 %v983, 1.442695
          %v990 = vpow.pop %v989
          %v991 = vmul.f32 %v984, 1.442695
          %v992 = vpow.pop %v991
          %v993 = vsel %vm892, %v986, 0.0
          %994 = vadd.xlane.f32.xlu0 %v993
          %v995 = vpop.xlane.xlu0 %994
          %v996 = vsel %vm892, %v988, 0.0
          %997 = vadd.xlane.f32.xlu0 %v996
          %v998 = vpop.xlane.xlu0 %997
          %v999 = vsel %vm892, %v990, 0.0
          %1000 = vadd.xlane.f32.xlu0 %v999
          %v1001 = vpop.xlane.xlu0 %1000
          %v1002 = vsel %vm892, %v992, 0.0
          %1003 = vadd.xlane.f32.xlu0 %v1002
          %v1004 = vpop.xlane.xlu0 %1003
          %v1005 = vrcp.pop %v995
          %v1006 = vrcp.pop %v998
          %v1007 = vrcp.pop %v1001
          %v1008 = vrcp.pop %v1004
          %v1009 = vmul.f32 %v986, %v1005
          %v1010 = vmul.f32 %v988, %v1006
          %v1011 = vmul.f32 %v990, %v1007
          %v1012 = vmul.f32 %v992, %v1008
          %v1013 = vpack.c.bf16 %v1009, %v1009
          %v1014 = vpack.c.bf16 %v1010, %v1010
          %v1015 = vpack.c.bf16 %v1011, %v1011
          %v1016 = vpack.c.bf16 %v1012, %v1012
          %v1018 = vsel %vm892, %v1013, 0
          %vm1020 = vcmask 1043456
          %v1022 = vsel %vm1020, %v884, 0
          %1024 = vmatpush.bf16.msra.mxu0 0
          %1025 = vmatpush.bf16.msra.mxu0 0
          %1026 = vmatpush.bf16.msra.mxu0 0
          %1027 = vmatpush.bf16.msra.mxu0 0
          %1028 = vmatpush.bf16.msra.mxu0 0
          %1029 = vmatpush.bf16.msra.mxu0 0
          %1030 = vmatpush.bf16.msra.mxu0 0
          %1031 = vmatpush.bf16.msra.mxu0 %v1022
          %1032 = vmatmul.bf16.gmra.mxu0 %v1018
          %v1033 = vpop.f32.mrf.mxu0
          %v1034 = vadd.f32 0.0, %v1033
          %v1035 = vpop.f32.mrf.mxu0
          %1036 = vdwg.mxu0
          %v1038 = vsel %vm892, %v1014, 0
          %v1041 = vsel %vm1020, %v885, 0
          %1043 = vmatpush.bf16.msra.mxu0 0
          %1044 = vmatpush.bf16.msra.mxu0 0
          %1045 = vmatpush.bf16.msra.mxu0 0
          %1046 = vmatpush.bf16.msra.mxu0 0
          %1047 = vmatpush.bf16.msra.mxu0 0
          %1048 = vmatpush.bf16.msra.mxu0 0
          %1049 = vmatpush.bf16.msra.mxu0 0
          %1050 = vmatpush.bf16.msra.mxu0 %v1041
          %1051 = vmatmul.bf16.gmra.mxu0 %v1038
          %v1052 = vpop.f32.mrf.mxu0
          %v1053 = vadd.f32 0.0, %v1052
          %v1054 = vpop.f32.mrf.mxu0
          %1055 = vdwg.mxu0
          %v1057 = vsel %vm892, %v1015, 0
          %v1060 = vsel %vm1020, %v886, 0
          %1062 = vmatpush.bf16.msra.mxu0 0
          %1063 = vmatpush.bf16.msra.mxu0 0
          %1064 = vmatpush.bf16.msra.mxu0 0
          %1065 = vmatpush.bf16.msra.mxu0 0
          %1066 = vmatpush.bf16.msra.mxu0 0
          %1067 = vmatpush.bf16.msra.mxu0 0
          %1068 = vmatpush.bf16.msra.mxu0 0
          %1069 = vmatpush.bf16.msra.mxu0 %v1060
          %1070 = vmatmul.bf16.gmra.mxu0 %v1057
          %v1071 = vpop.f32.mrf.mxu0
          %v1072 = vadd.f32 0.0, %v1071
          %v1073 = vpop.f32.mrf.mxu0
          %1074 = vdwg.mxu0
          %v1076 = vsel %vm892, %v1016, 0
          %v1079 = vsel %vm1020, %v887, 0
          %1081 = vmatpush.bf16.msra.mxu0 0
          %1082 = vmatpush.bf16.msra.mxu0 0
          %1083 = vmatpush.bf16.msra.mxu0 0
          %1084 = vmatpush.bf16.msra.mxu0 0
          %1085 = vmatpush.bf16.msra.mxu0 0
          %1086 = vmatpush.bf16.msra.mxu0 0
          %1087 = vmatpush.bf16.msra.mxu0 0
          %1088 = vmatpush.bf16.msra.mxu0 %v1079
          %1089 = vmatmul.bf16.gmra.mxu0 %v1076
          %v1090 = vpop.f32.mrf.mxu0
          %v1091 = vadd.f32 0.0, %v1090
          %v1092 = vpop.f32.mrf.mxu0
          %1093 = vdwg.mxu0
          %v1094 = vpack.c.bf16 %v1034, %v1034
          %1095 = vst.msk [vmem:[#allocation5] sm:$0xf] %vm822, %v1094
          %v1096 = vpack.c.bf16 %v1053, %v1053
          %1098 = vrot.lane.b32.xlu0 %v1096, 8
          %v1099 = vpop.permute.xlu0 %1098
          %vm1101 = vcmask 126016
          %1102 = vst.msk [vmem:[#allocation5] sm:$0xf] %vm1101, %v1099
          %v1103 = vpack.c.bf16 %v1072, %v1072
          %1105 = vrot.lane.b32.xlu0 %v1103, 16
          %v1106 = vpop.permute.xlu0 %1105
          %vm1108 = vcmask 191616
          %1109 = vst.msk [vmem:[#allocation5] sm:$0xf] %vm1108, %v1106
          %v1110 = vpack.c.bf16 %v1091, %v1091
          %1112 = vrot.lane.b32.xlu0 %v1110, 24
          %v1113 = vpop.permute.xlu0 %1112
          %vm1115 = vcmask 257216
          %1116 = vst.msk [vmem:[#allocation5] sm:$0xf] %vm1115, %v1113
          %v1117 = vld [vmem:[#allocation5] sm:$0xf]
          %v1118 = vld [vmem:[#allocation13] sm:$0xf]
          %v1119 = vld [vmem:[#allocation13 + $0x4] sm:$0xf]
          %v1120 = vld [vmem:[#allocation13 + $0x8] sm:$0xf]
          %v1121 = vld [vmem:[#allocation13 + $0xc] sm:$0xf]
          %v1122 = vld [vmem:[%s9] sm:$0x1]
          %v1124 = vperm.slane %v1122, 0
          %v1130 = vunpack.c.l.b16 %v1118
          %v1131 = vunpack.c.l.b16 %v1119
          %v1132 = vunpack.c.l.b16 %v1120
          %v1133 = vunpack.c.l.b16 %v1121
          %v1134 = vpack.c.b16 %v1131, %v1130
          %v1135 = vpack.c.b16 %v1133, %v1132
          %v1139 = vsel %vm738, %v1117, 0
          %1141 = vmatpush.bf16.msra.mxu0 0
          %1142 = vmatpush.bf16.msra.mxu0 0
          %1143 = vmatpush.bf16.msra.mxu0 0
          %1144 = vmatpush.bf16.msra.mxu0 0
          %1145 = vmatpush.bf16.msra.mxu0 0
          %1146 = vmatpush.bf16.msra.mxu0 0
          %1147 = vmatpush.bf16.msra.mxu0 %v1135
          %1148 = vmatpush.bf16.msra.mxu0 %v1134
          %1149 = vmatmul.bf16.gmra.mxu0 %v1139
          %v1150 = vpop.f32.mrf.mxu0
          %v1151 = vadd.f32 %v1124, %v1150
          %v1152 = vpop.f32.mrf.mxu0
          %1153 = vdwg.mxu0
          %v1154 = vadd.f32 %v716, %v1151
          %v1155 = vld [vmem:[%s10] sm:$0x1]
          %v1156 = vld [vmem:[%s11] sm:$0x1]
          %v1157 = vsel %vm738, %v1154, 0.0
          %1158 = vadd.xlane.f32.xlu0 %v1157
          %v1159 = vpop.xlane.xlu0 %1158
          %v1160 = vrcp.pop 32.0
          %v1161 = vmul.f32 32.0, %v1160
          %v1162 = vsub.f32 1.0, %v1161
          %v1163 = vmul.f32 %v1160, %v1162
          %v1164 = vadd.f32 %v1160, %v1163
          %vm1165 = vweird.f32 %v1160
          %v1166 = vsel %vm1165, %v1160, %v1164
          %v1167 = vmul.f32 %v1159, %v1166
          %v1168 = vsub.f32 %v1154, %v1167
          %v1169 = vmul.f32 %v1168, %v1168
          %v1170 = vsel %vm738, %v1169, 0.0
          %1171 = vadd.xlane.f32.xlu0 %v1170
          %v1172 = vpop.xlane.xlu0 %1171
          %v1173 = vmul.f32 %v1172, %v1166
          %v1174 = vadd.f32 %v1173, 1e-12
          %v1175 = vrsqrt.pop %v1174
          %v1176 = vmul.f32 %v1175, %v1174
          %v1177 = vmul.f32 %v1176, %v1175
          %v1178 = vmul.f32 0.5, %v1177
          %v1179 = vsub.f32 1.5, %v1178
          %v1180 = vmul.f32 %v1175, %v1179
          %vm1181 = vweird.f32 %v1174
          %vm1182 = vweird.f32 %v1175
          %vm1183 = vmor %vm1181, %vm1182
          %v1184 = vsel %vm1183, %v1175, %v1180
          %v1185 = vmul.f32 %v1168, %v1184
          %v1187 = vperm.slane %v1155, 0
          %v1189 = vmul.f32 %v1185, %v1187
          %v1191 = vperm.slane %v1156, 0
          %v1193 = vadd.f32 %v1189, %v1191
          %1194 = vst.msk [vmem:[#allocation6] sm:$0xff] %vm738, %v1193
          %v1195 = vpack.c.bf16 %v1193, %v1193
          %vm1196 = vcmask 257024
          %1197 = vst.msk [vmem:[#allocation5] sm:$0xf] %vm1196, %v1195
          %1198 = vst.msk [vmem:[#allocation7] sm:$0xff] %vm738, 0.0
        $region112: #{tpu_custom_call.1} parent=91 // pred_fallthru
          _
        %v1199 = vld [vmem:[#allocation5] sm:$0xf]
        %v1200 = vld [vmem:[#allocation14] sm:$0xf]
        %v1201 = vld [vmem:[#allocation14 + $0x4] sm:$0xf]
        %v1202 = vld [vmem:[#allocation14 + $0x8] sm:$0xf]
        %v1203 = vld [vmem:[#allocation14 + $0xc] sm:$0xf]
        %v1204 = vld [vmem:[%s704] sm:$0x1]
        %v1206 = vperm.slane %v1204, 0
        %v1212 = vunpack.c.l.b16 %v1200
        %v1213 = vunpack.c.l.b16 %v1201
        %v1214 = vunpack.c.l.b16 %v1202
        %v1215 = vunpack.c.l.b16 %v1203
        %v1216 = vpack.c.b16 %v1213, %v1212
        %v1217 = vpack.c.b16 %v1215, %v1214
        %vm1220 = vcmask 261120
        %v1222 = vsel %vm1220, %v1199, 0
        %1224 = vmatpush.bf16.msra.mxu0 0
        %1225 = vmatpush.bf16.msra.mxu0 0
        %1226 = vmatpush.bf16.msra.mxu0 0
        %1227 = vmatpush.bf16.msra.mxu0 0
        %1228 = vmatpush.bf16.msra.mxu0 0
        %1229 = vmatpush.bf16.msra.mxu0 0
        %1230 = vmatpush.bf16.msra.mxu0 %v1217
        %1231 = vmatpush.bf16.msra.mxu0 %v1216
        %1232 = vmatmul.bf16.gmra.mxu0 %v1222
        %v1233 = vpop.f32.mrf.mxu0
        %v1234 = vadd.f32 %v1206, %v1233
        %v1235 = vpop.f32.mrf.mxu0
        %1236 = vdwg.mxu0
        %v1237 = vmul.f32 %v1234, 0.5
        %v1238 = vmul.f32 %v1234, 0.044715
        %v1239 = vmul.f32 %v1238, %v1234
        %v1240 = vmul.f32 %v1239, %v1234
        %v1241 = vadd.f32 %v1234, %v1240
        %v1242 = vmul.f32 %v1241, 0.7978846
        %v1243 = vtanh.pop %v1242
        %v1244 = vadd.f32 %v1243, 1.0
        %v1245 = vmul.f32 %v1237, %v1244
        %v1246 = vld [vmem:[#allocation7] sm:$0xff]
        %v1247 = vpack.c.bf16 %v1245, %v1245
        %v1248 = vld [vmem:[%s709] sm:$0xf]
        %v1249 = vld [vmem:[%s709 + $0x4] sm:$0xf]
        %v1250 = vld [vmem:[%s709 + $0x8] sm:$0xf]
        %v1251 = vld [vmem:[%s709 + $0xc] sm:$0xf]
        %v1252 = vld [vmem:[%s709 + $0x10] sm:$0xf]
        %v1253 = vld [vmem:[%s709 + $0x14] sm:$0xf]
        %v1254 = vld [vmem:[%s709 + $0x18] sm:$0xf]
        %v1255 = vld [vmem:[%s709 + $0x1c] sm:$0xf]
        %v1264 = vunpack.c.l.b16 %v1248
        %v1265 = vunpack.c.l.b16 %v1249
        %v1266 = vunpack.c.l.b16 %v1250
        %v1267 = vunpack.c.l.b16 %v1251
        %v1268 = vunpack.c.l.b16 %v1252
        %v1269 = vunpack.c.l.b16 %v1253
        %v1270 = vunpack.c.l.b16 %v1254
        %v1271 = vunpack.c.l.b16 %v1255
        %v1272 = vpack.c.b16 %v1265, %v1264
        %v1273 = vpack.c.b16 %v1267, %v1266
        %v1274 = vpack.c.b16 %v1269, %v1268
        %v1275 = vpack.c.b16 %v1271, %v1270
        %vm1280 = vcmask 523264
        %v1282 = vsel %vm1280, %v1247, 0
        %1284 = vmatpush.bf16.msra.mxu0 0
        %1285 = vmatpush.bf16.msra.mxu0 0
        %1286 = vmatpush.bf16.msra.mxu0 0
        %1287 = vmatpush.bf16.msra.mxu0 0
        %1288 = vmatpush.bf16.msra.mxu0 %v1275
        %1289 = vmatpush.bf16.msra.mxu0 %v1274
        %1290 = vmatpush.bf16.msra.mxu0 %v1273
        %1291 = vmatpush.bf16.msra.mxu0 %v1272
        %1292 = vmatmul.bf16.gmra.mxu0 %v1282
        %v1293 = vpop.f32.mrf.mxu0
        %v1294 = vadd.f32 0.0, %v1293
        %v1295 = vpop.f32.mrf.mxu0
        %1296 = vdwg.mxu0
        %v1297 = vadd.f32 %v1246, %v1294
        %1298 = vst.msk [vmem:[#allocation7] sm:$0xff] %vm1220, %v1297
        // Predicated region
        $region113: #{tpu_custom_call.1} parent=91 // pred_check
          %p1299 = pneg %p712
        $region114: #{tpu_custom_call.1} parent=91 // pred_check_branch
          %1301 = sbr.rel (%p1299) target = $region116
        $region115: #{tpu_custom_call.1} parent=91 // pred_region
          %v1302 = vld [vmem:[#allocation7] sm:$0xff]
          %v1303 = vld [vmem:[%s15] sm:$0x1]
          %v1305 = vperm.slane %v1303, 0
          %v1307 = vadd.f32 %v1302, %v1305
          %v1308 = vld [vmem:[#allocation6] sm:$0xff]
          %v1309 = vadd.f32 %v1307, %v1308
          %v1310 = vld [vmem:[%s16] sm:$0x1]
          %v1311 = vld [vmem:[%s17] sm:$0x1]
          %v1312 = vsel %vm1220, %v1309, 0.0
          %1313 = vadd.xlane.f32.xlu0 %v1312
          %v1314 = vpop.xlane.xlu0 %1313
          %v1315 = vrcp.pop 32.0
          %v1316 = vmul.f32 32.0, %v1315
          %v1317 = vsub.f32 1.0, %v1316
          %v1318 = vmul.f32 %v1315, %v1317
          %v1319 = vadd.f32 %v1315, %v1318
          %vm1320 = vweird.f32 %v1315
          %v1321 = vsel %vm1320, %v1315, %v1319
          %v1322 = vmul.f32 %v1314, %v1321
          %v1323 = vsub.f32 %v1309, %v1322
          %v1324 = vmul.f32 %v1323, %v1323
          %v1325 = vsel %vm1220, %v1324, 0.0
          %1326 = vadd.xlane.f32.xlu0 %v1325
          %v1327 = vpop.xlane.xlu0 %1326
          %v1328 = vmul.f32 %v1327, %v1321
          %v1329 = vadd.f32 %v1328, 1e-12
          %v1330 = vrsqrt.pop %v1329
          %v1331 = vmul.f32 %v1330, %v1329
          %v1332 = vmul.f32 %v1331, %v1330
          %v1333 = vmul.f32 0.5, %v1332
          %v1334 = vsub.f32 1.5, %v1333
          %v1335 = vmul.f32 %v1330, %v1334
          %vm1336 = vweird.f32 %v1329
          %vm1337 = vweird.f32 %v1330
          %vm1338 = vmor %vm1336, %vm1337
          %v1339 = vsel %vm1338, %v1330, %v1335
          %v1340 = vmul.f32 %v1323, %v1339
          %v1342 = vperm.slane %v1310, 0
          %v1344 = vmul.f32 %v1340, %v1342
          %v1346 = vperm.slane %v1311, 0
          %v1348 = vadd.f32 %v1344, %v1346
          %1349 = vst.msk [vmem:[%s697] sm:$0xff] %vm1220, %v1348
        $region116: #{tpu_custom_call.1} parent=91 // pred_fallthru
          _
        %s1350 = sand.u32 %s460, 1
        %s1351 = scalar_lea.sflag [#allocation10], %s1350
        %s1352 = sand.u32 %s460, 1
        %s1353 = smul.addr %s1352, 8
        %s1354 = scalar_lea.vmem [#allocation16], %s1353
        // Predicated region
        $region117: #{tpu_custom_call.1} parent=91 // pred_check
          %p1355 = pneg %p470
        $region118: #{tpu_custom_call.1} parent=91 // pred_check_branch
          %1357 = sbr.rel (%p1355) target = $region120
        $region119: #{tpu_custom_call.1} parent=91 // pred_region
          %1359 = vsyncadd %s1351, 0
          %s1360 = smul.addr %s41, 8
          %s1361 = scalar_lea.hbm %s18, %s1360
          %s1363 = sshll.u32 %s1354, 4
          %s1364 = int_to_ptr.vmem [resolvable:$true] %s1363
          %s1365 = sshll.u32 %s1361, 4
          %s1366 = int_to_ptr.hbm [resolvable:$true] %s1365
          %1368 = dma.vmem_to_hbm [thread:$0]  %s1364, 128, %s1366, %s1351
        $region120: #{tpu_custom_call.1} parent=91 // pred_fallthru
          _
      $region92: #{tpu_custom_call.1} parent=5 // pred_fallthru
        _
      %p1369 = scmp.le.s32.totalorder 2, %s32
      // Predicated region
      $region121: #{tpu_custom_call.1} parent=5 // pred_check
        %p1370 = pneg %p1369
      $region122: #{tpu_custom_call.1} parent=5 // pred_check_branch
        %1372 = sbr.rel (%p1370) target = $region124
      $region123: #{tpu_custom_call.1} parent=5 // pred_region
        %s1373 = ssub.s32 %s32, 2
        // Predicated region
        $region125: #{tpu_custom_call.1} parent=123 // pred_check
          %p1374 = pneg %p476
        $region126: #{tpu_custom_call.1} parent=123 // pred_check_branch
          %1376 = sbr.rel (%p1374) target = $region128
        $region127: #{tpu_custom_call.1} parent=123 // pred_region
          %s1377 = sand.u32 %s461, 1
          %s1378 = scalar_lea.sflag [#allocation10], %s1377
          %s1379 = sand.u32 %s461, 1
          %s1380 = smul.addr %s1379, 8
          %s1381 = scalar_lea.vmem [#allocation16], %s1380
          %1383 = dma.done %s1378, 128
        $region128: #{tpu_custom_call.1} parent=123 // pred_fallthru
          _
      $region124: #{tpu_custom_call.1} parent=5 // pred_fallthru
        _
    $region6: #{tpu_custom_call.1} parent=1 // loop_footer
      %s36 = sadd.s32 1, %s32
    $region7: #{tpu_custom_call.1} parent=1 // loop_footer_branch
      %31 = sbr.rel target = $region3
    $region8: #{tpu_custom_call.1} parent=1 // loop_exit
      _
    %1384 = vsyncpa [#allocation9], 1
    %s1385 = scalar_lea.sflag [#allocation9], 1
    %1386 = vsyncpa %s1385, 1
    %1387 = vsyncpa [#allocation12], 1
    %1388 = vsyncpa [#allocation15], 1
    %1389 = vsyncpa [#allocation10], 1
    %s1390 = scalar_lea.sflag [#allocation10], 1
    %1391 = vsyncpa %s1390, 1

</llo_original>
